<compile_context>
chip_gen: v7x
topology: tpu7x:2x2x1
jax: 0.10.0
libtpu: 0.0.40
codegen_flags: <defaults>
</compile_context>

<pallas_src>
import functools

import jax
import jax.numpy as jnp
from jax import lax
from jax.experimental import pallas as pl
from jax.experimental.pallas import tpu as pltpu

_GAMMA_PAD = 128  # gamma's 2 output lanes, zero-padded to a full 128-lane slab


def _graph_attention_kernel(xq_ref, xkv_ref, adj_ref, wqg_ref, wkv_ref, wp_ref,
                            bg_ref, bp_ref, out_ref, *, num_heads, head_dim,
                            scale, use_exp, compute_dtype, softmax_dtype):
    H, C = num_heads, head_dim
    HC = H * C

    xq = xq_ref[0]                                   # (Tq, C)  compute dtype
    xkv = xkv_ref[0]                                 # (N,  C)  compute dtype

    # One fused matmul: q for all heads + the 2 gamma logits (lanes HC:HC+2).
    qg = jnp.dot(xq, wqg_ref[...],
                 preferred_element_type=jnp.float32)                 # (Tq, HC+128)
    # One fused matmul: k|v for all heads over the full key length.
    kv = jnp.dot(xkv, wkv_ref[...],
                 preferred_element_type=jnp.float32).astype(compute_dtype)  # (N, 2*HC)

    # Head-independent gamma for this query tile.
    g = qg[:, HC:HC + 2] + bg_ref[...]               # (Tq, 2) f32
    if use_exp:
        g = jnp.exp(g)
    g0 = g[:, 0:1] * scale                           # fold 1/sqrt(C) into gamma0
    # gamma1 * adj, shared by all heads; adj arrives as int8 and is promoted here.
    local = g[:, 1:2] * adj_ref[0].astype(jnp.float32)              # (Tq, N) f32

    approx = compute_dtype != jnp.float32
    wp = wp_ref[...]                                 # (HC, C) compute dtype
    acc = jnp.zeros((xq.shape[0], C), jnp.float32)   # (Tq, C) output accumulator

    for h in range(H):      # static H -> fully unrolled, static lane slices
        q = qg[:, h * C:(h + 1) * C].astype(compute_dtype)
        k = kv[:, h * C:(h + 1) * C]
        v = kv[:, (H + h) * C:(H + h + 1) * C]

        # q @ k^T via dot_general contracting the last axes (no explicit .T).
        s = lax.dot_general(q, k, (((1,), (1,)), ((), ())),
                            preferred_element_type=jnp.float32)     # (Tq, N)
        a = g0 * s + local
        m = jnp.max(a, axis=-1, keepdims=True)
        if softmax_dtype == jnp.float32:
            e = jnp.exp(a - m)                                       # (Tq, N) f32
            denom = jnp.sum(e, axis=-1, keepdims=True)
            p = e.astype(compute_dtype)
        else:
            # bf16 exp: ~2x EUP throughput on v6e/v7x; keep the row sum in f32.
            e = jnp.exp((a - m).astype(softmax_dtype))               # (Tq, N) bf16
            denom = jnp.sum(e.astype(jnp.float32), axis=-1, keepdims=True)
            p = e.astype(compute_dtype)

        # Unnormalized P @ V, then scale the small (Tq, C) result by 1/rowsum
        # (same math as normalizing P, but N*C instead of N*N VPU multiplies).
        ph = jnp.dot(p, v, preferred_element_type=jnp.float32)      # (Tq, C)
        ph = ph * pl.reciprocal(denom, approx=approx)
        # Fold the output projection per head -> no lane-offset head concat.
        acc = acc + jnp.dot(ph.astype(compute_dtype),
                            wp[h * C:(h + 1) * C, :],
                            preferred_element_type=jnp.float32)

    out_ref[0, :, :] = (acc + bp_ref[...]).astype(out_ref.dtype)


def _pick_block_q(n, block_q):
    """Query-tile size: full N for small graphs, else a 32-aligned tile <= 256."""
    if block_q is None:
        if n <= 512:
            return n
        block_q = 256
    if block_q >= n:
        return n
    return max(32, (min(block_q, n) // 32) * 32)


def _default_vmem_limit(n, tq, c, h, cbytes, out_bytes):
    """Rough per-step VMEM estimate (weights + double-buffered streams + temps)."""
    hc = h * c
    weights = 2 * (c * (hc + _GAMMA_PAD) + 2 * c * hc + hc * c) * cbytes
    streams = 2 * ((tq * c + n * c) * cbytes + tq * n + tq * c * out_bytes)
    temps = ((tq * (hc + _GAMMA_PAD) + 2 * n * hc) * 4   # qg + kv f32 accumulators
             + 2 * n * hc * cbytes                        # kv in compute dtype
             + 4 * tq * n * 4                             # local / s / a / e tiles
             + 4 * tq * c * 4)                            # per-head + output temps
    est = weights + streams + temps
    try:
        cap = int(pltpu.get_tpu_info().vmem_capacity_bytes)
    except Exception:
        cap = 64 * 1024 * 1024      # v7x per-core VMEM; safe lower bound everywhere
    return min(max(32 * 1024 * 1024, int(est * 1.5)), (cap * 7) // 8)


def graph_attention(x, adj, params, *, num_heads, use_exp=True,
                    compute_dtype=jnp.bfloat16, softmax_dtype=None,
                    block_q=None, vmem_limit_bytes=None):
    """Pallas TPU forward of GraphAttention.

    adj is assumed to be a {0, 1} adjacency mask (streamed as int8).  On v5e pass
    softmax_dtype=jnp.float32 (no bf16 EUP); the default tracks compute_dtype.
    """
    B, N, C = x.shape
    H = num_heads
    HC = H * C
    scale = float(C) ** (-0.5)
    if softmax_dtype is None:
        softmax_dtype = jnp.float32 if compute_dtype == jnp.float32 else jnp.bfloat16

    w_qkv = params["w_qkv"]       # (3*H*C, C)  torch Linear weight layout
    w_proj = params["w_proj"]     # (C, H*C)
    b_proj = params["b_proj"]     # (C,)
    w_gamma = params["w_gamma"]   # (2, C)
    b_gamma = params["b_gamma"]   # (2,)

    # Pre-transpose once to x @ W^T layouts; fuse gamma's two columns (zero-padded
    # to a 128-lane slab) into the q projection.  MXU operands in compute_dtype,
    # biases stay f32 (added to f32 accumulators inside the kernel).
    w_q = w_qkv[0 * HC:1 * HC, :]
    w_k = w_qkv[1 * HC:2 * HC, :]
    w_v = w_qkv[2 * HC:3 * HC, :]
    wg_pad = jnp.pad(w_gamma.T, ((0, 0), (0, _GAMMA_PAD - w_gamma.shape[0])))
    wqg_t = jnp.concatenate([w_q.T, wg_pad], axis=1).astype(compute_dtype)  # (C, HC+128)
    wkv_t = jnp.concatenate([w_k.T, w_v.T], axis=1).astype(compute_dtype)   # (C, 2*HC)
    wp_t = w_proj.T.astype(compute_dtype)                                   # (HC, C)
    bg = b_gamma.reshape(1, 2).astype(jnp.float32)
    bp = b_proj.reshape(1, C).astype(jnp.float32)

    x_c = x.astype(compute_dtype)
    adj_i8 = adj.astype(jnp.int8)    # 0/1 mask -> exact; 4x less HBM than f32

    tq = _pick_block_q(N, block_q)
    n_q = pl.cdiv(N, tq)
    if vmem_limit_bytes is None:
        vmem_limit_bytes = _default_vmem_limit(
            N, tq, C, H, jnp.dtype(compute_dtype).itemsize,
            jnp.dtype(x.dtype).itemsize)

    kernel = functools.partial(
        _graph_attention_kernel, num_heads=H, head_dim=C, scale=scale,
        use_exp=use_exp, compute_dtype=compute_dtype, softmax_dtype=softmax_dtype)

    return pl.pallas_call(
        kernel,
        out_shape=jax.ShapeDtypeStruct((B, N, C), x.dtype),
        grid_spec=pltpu.PrefetchScalarGridSpec(
            num_scalar_prefetch=0,
            grid=(B, n_q),
            in_specs=[
                pl.BlockSpec((1, tq, C), lambda b, q: (b, q, 0)),        # x (query rows)
                pl.BlockSpec((1, N, C), lambda b, q: (b, 0, 0)),         # x (full, k/v)
                pl.BlockSpec((1, tq, N), lambda b, q: (b, q, 0)),        # adj (int8)
                pl.BlockSpec((C, HC + _GAMMA_PAD), lambda b, q: (0, 0)),  # [Wq|Wgamma]^T
                pl.BlockSpec((C, 2 * HC), lambda b, q: (0, 0)),          # [Wk|Wv]^T
                pl.BlockSpec((HC, C), lambda b, q: (0, 0)),              # Wproj^T
                pl.BlockSpec((1, 2), lambda b, q: (0, 0)),               # b_gamma
                pl.BlockSpec((1, C), lambda b, q: (0, 0)),               # b_proj
            ],
            out_specs=pl.BlockSpec((1, tq, C), lambda b, q: (b, q, 0)),
        ),
        compiler_params=pltpu.CompilerParams(
            dimension_semantics=("parallel", "parallel"),
            vmem_limit_bytes=vmem_limit_bytes),
    )(x_c, x_c, adj_i8, wqg_t, wkv_t, wp_t, bg, bp)


def graph_attention_reference(x, adj, params, *, num_heads, use_exp=True):
    """Pure-JAX reference matching the PyTorch forward exactly."""
    B, N, C = x.shape
    H = num_heads
    scale = float(C) ** (-0.5)

    qkv = x @ params["w_qkv"].T                                # (B, N, 3*H*C)
    qkv = qkv.reshape(B, N, 3, H, C).transpose(0, 3, 1, 2, 4)  # (B, H, N, 3, C)
    q, k, v = qkv[:, :, :, 0], qkv[:, :, :, 1], qkv[:, :, :, 2]

    attn = jnp.einsum("bhnc,bhmc->bhnm", q, k) * scale         # (B, H, N, N)
    gamma = x @ params["w_gamma"].T + params["b_gamma"]        # (B, N, 2)
    gamma = gamma[:, None]                                     # (B, 1, N, 2)
    if use_exp:
        gamma = jnp.exp(gamma)
    attn = gamma[..., 0:1] * attn + gamma[..., 1:2] * adj[:, None]
    attn = jax.nn.softmax(attn, axis=-1)
    out = jnp.einsum("bhnm,bhmc->bhnc", attn, v)               # (B, H, N, C)
    out = out.transpose(0, 2, 1, 3).reshape(B, N, H * C)
    return out @ params["w_proj"].T + params["b_proj"]


def init_params(key, dim, num_heads):
    """Deterministic synthetic parameters with PyTorch Linear-style shapes."""
    k1, k2, k3, k4, k5 = jax.random.split(key, 5)
    bound = 1.0 / (dim ** 0.5)
    return {
        # qkv_projection: Linear(dim, dim*num_heads*3, bias=False)
        "w_qkv": jax.random.uniform(k1, (3 * num_heads * dim, dim),
                                    jnp.float32, -bound, bound),
        # proj: Linear(dim*num_heads, dim)
        "w_proj": jax.random.uniform(k2, (dim, num_heads * dim),
                                     jnp.float32, -bound, bound),
        "b_proj": jax.random.uniform(k3, (dim,), jnp.float32, -bound, bound),
        # predict_gamma: Linear(dim, 2) with weight ~ U(0, 0.01)
        "w_gamma": jax.random.uniform(k4, (2, dim), jnp.float32, 0.0, 0.01),
        "b_gamma": jax.random.uniform(k5, (2,), jnp.float32, -bound, bound),
    }


if __name__ == "__main__":
    B, N, C, H = 2, 8, 32, 4

    key = jax.random.PRNGKey(0)
    kx, ka, kp = jax.random.split(key, 3)

    x = jax.random.normal(kx, (B, N, C), jnp.float32)
    # Symmetric 0/1 adjacency with self-loops.
    a = (jax.random.uniform(ka, (B, N, N)) > 0.5).astype(jnp.float32)
    adj = jnp.clip(a + jnp.transpose(a, (0, 2, 1)) + jnp.eye(N)[None], 0.0, 1.0)

    params = init_params(kp, C, H)

    ref = graph_attention_reference(x, adj, params, num_heads=H, use_exp=True)

    # Exact (f32 compute) path: tight structural-correctness check.
    out_f32 = jax.block_until_ready(
        graph_attention(x, adj, params, num_heads=H, use_exp=True,
                        compute_dtype=jnp.float32))
    assert out_f32.shape == (B, N, C)
    assert jnp.allclose(out_f32, ref, rtol=1e-3, atol=1e-3), "f32 mismatch vs reference"

    # Default optimized path: bf16 MXU operands + bf16 exp, f32 accumulation.
    out_bf16 = jax.block_until_ready(
        graph_attention(x, adj, params, num_heads=H, use_exp=True,
                        compute_dtype=jnp.bfloat16))
    assert out_bf16.shape == (B, N, C)
    ref_scale = float(jnp.max(jnp.abs(ref)))
    rel_err = float(jnp.max(jnp.abs(out_bf16 - ref))) / (ref_scale + 1e-6)
    assert rel_err < 5e-2, f"bf16 relative error too large: {rel_err}"

    print("KERNEL_OK")
</pallas_src>

<mosaic_0001>
module attributes {stable_mosaic.version = 11 : i64} {
  func.func @_graph_attention_kernel(%arg0: i32, %arg1: i32, %arg2: memref<1x8x32xf32, #tpu.memory_space<vmem>>, %arg3: memref<1x8x32xf32, #tpu.memory_space<vmem>>, %arg4: memref<1x8x8xi8, #tpu.memory_space<vmem>>, %arg5: memref<32x256xf32, #tpu.memory_space<vmem>>, %arg6: memref<32x256xf32, #tpu.memory_space<vmem>>, %arg7: memref<128x32xf32, #tpu.memory_space<vmem>>, %arg8: memref<1x2xf32, #tpu.memory_space<vmem>>, %arg9: memref<1x32xf32, #tpu.memory_space<vmem>>, %arg10: memref<1x8x32xf32, #tpu.memory_space<vmem>>) attributes {dimension_semantics = [#tpu.dimension_semantics<parallel>, #tpu.dimension_semantics<parallel>], iteration_bounds = array<i64: 2, 1>, scalar_prefetch = 0 : i64, scratch_operands = 0 : i64, tpu.core_type = #tpu.core_type<tc>, window_params = [{transform_indices = @transform_0, window_bounds = array<i64: 1, 8, 32>}, {transform_indices = @transform_1, window_bounds = array<i64: 1, 8, 32>}, {transform_indices = @transform_2, window_bounds = array<i64: 1, 8, 8>}, {pipeline_mode = #tpu.pipeline_mode<synchronous>, transform_indices = @transform_3, window_bounds = array<i64: 32, 256>}, {pipeline_mode = #tpu.pipeline_mode<synchronous>, transform_indices = @transform_4, window_bounds = array<i64: 32, 256>}, {pipeline_mode = #tpu.pipeline_mode<synchronous>, transform_indices = @transform_5, window_bounds = array<i64: 128, 32>}, {pipeline_mode = #tpu.pipeline_mode<synchronous>, transform_indices = @transform_6, window_bounds = array<i64: 1, 2>}, {pipeline_mode = #tpu.pipeline_mode<synchronous>, transform_indices = @transform_7, window_bounds = array<i64: 1, 32>}, {transform_indices = @transform_8, window_bounds = array<i64: 1, 8, 32>}]} {
    %c0 = arith.constant 0 : index
    %c0_0 = arith.constant 0 : index
    %c0_1 = arith.constant 0 : index
    %0 = vector.load %arg2[%c0, %c0_0, %c0_1] : memref<1x8x32xf32, #tpu.memory_space<vmem>>, vector<1x8x32xf32>
    %1 = vector.shape_cast %0 : vector<1x8x32xf32> to vector<8x32xf32>
    %c0_2 = arith.constant 0 : index
    %c0_3 = arith.constant 0 : index
    %c0_4 = arith.constant 0 : index
    %2 = vector.load %arg3[%c0_2, %c0_3, %c0_4] : memref<1x8x32xf32, #tpu.memory_space<vmem>>, vector<1x8x32xf32>
    %3 = vector.shape_cast %2 : vector<1x8x32xf32> to vector<8x32xf32>
    %c0_5 = arith.constant 0 : index
    %c0_6 = arith.constant 0 : index
    %4 = vector.load %arg5[%c0_5, %c0_6] : memref<32x256xf32, #tpu.memory_space<vmem>>, vector<32x256xf32>
    %cst = arith.constant dense<0.000000e+00> : vector<8x256xf32>
    %5 = tpu.matmul %1, %4, %cst {dimension_numbers = #tpu.dot_dimension_numbers<[1], [0], [0], [1], [0, 0, 1, 1], [], []>} : vector<8x32xf32>, vector<32x256xf32>, vector<8x256xf32> -> vector<8x256xf32>
    %c0_7 = arith.constant 0 : index
    %c0_8 = arith.constant 0 : index
    %6 = vector.load %arg6[%c0_7, %c0_8] : memref<32x256xf32, #tpu.memory_space<vmem>>, vector<32x256xf32>
    %cst_9 = arith.constant dense<0.000000e+00> : vector<8x256xf32>
    %7 = tpu.matmul %3, %6, %cst_9 {dimension_numbers = #tpu.dot_dimension_numbers<[1], [0], [0], [1], [0, 0, 1, 1], [], []>} : vector<8x32xf32>, vector<32x256xf32>, vector<8x256xf32> -> vector<8x256xf32>
    %8 = vector.extract_strided_slice %5 {offsets = [0, 128], sizes = [8, 2], strides = [1, 1]} : vector<8x256xf32> to vector<8x2xf32>
    %c0_10 = arith.constant 0 : index
    %c0_11 = arith.constant 0 : index
    %9 = vector.load %arg8[%c0_10, %c0_11] : memref<1x2xf32, #tpu.memory_space<vmem>>, vector<1x2xf32>
    %10 = vector.broadcast %9 : vector<1x2xf32> to vector<8x2xf32>
    %11 = arith.addf %8, %10 : vector<8x2xf32>
    %12 = math.exp %11 : vector<8x2xf32>
    %13 = vector.extract_strided_slice %12 {offsets = [0, 0], sizes = [8, 1], strides = [1, 1]} : vector<8x2xf32> to vector<8x1xf32>
    %cst_12 = arith.constant 0.176776692 : f32
    %14 = vector.broadcast %cst_12 : f32 to vector<8x1xf32>
    %15 = arith.mulf %13, %14 : vector<8x1xf32>
    %16 = vector.extract_strided_slice %12 {offsets = [0, 1], sizes = [8, 1], strides = [1, 1]} : vector<8x2xf32> to vector<8x1xf32>
    %c0_13 = arith.constant 0 : index
    %c0_14 = arith.constant 0 : index
    %c0_15 = arith.constant 0 : index
    %17 = vector.load %arg4[%c0_13, %c0_14, %c0_15] : memref<1x8x8xi8, #tpu.memory_space<vmem>>, vector<1x8x8xi8>
    %18 = vector.shape_cast %17 : vector<1x8x8xi8> to vector<8x8xi8>
    %19 = arith.sitofp %18 : vector<8x8xi8> to vector<8x8xf32>
    %20 = vector.broadcast %16 : vector<8x1xf32> to vector<8x8xf32>
    %21 = arith.mulf %20, %19 : vector<8x8xf32>
    %c0_16 = arith.constant 0 : index
    %c0_17 = arith.constant 0 : index
    %22 = vector.load %arg7[%c0_16, %c0_17] : memref<128x32xf32, #tpu.memory_space<vmem>>, vector<128x32xf32>
    %cst_18 = arith.constant 0.000000e+00 : f32
    %23 = vector.broadcast %cst_18 : f32 to vector<8x32xf32>
    %24 = vector.extract_strided_slice %5 {offsets = [0, 0], sizes = [8, 32], strides = [1, 1]} : vector<8x256xf32> to vector<8x32xf32>
    %25 = vector.extract_strided_slice %7 {offsets = [0, 0], sizes = [8, 32], strides = [1, 1]} : vector<8x256xf32> to vector<8x32xf32>
    %26 = vector.extract_strided_slice %7 {offsets = [0, 128], sizes = [8, 32], strides = [1, 1]} : vector<8x256xf32> to vector<8x32xf32>
    %cst_19 = arith.constant dense<0.000000e+00> : vector<8x8xf32>
    %27 = tpu.matmul %24, %25, %cst_19 {dimension_numbers = #tpu.dot_dimension_numbers<[1], [1], [0], [0], [0, 0, 1, 0], [], []>} : vector<8x32xf32>, vector<8x32xf32>, vector<8x8xf32> -> vector<8x8xf32>
    %28 = vector.broadcast %15 : vector<8x1xf32> to vector<8x8xf32>
    %29 = arith.mulf %28, %27 : vector<8x8xf32>
    %30 = arith.addf %29, %21 : vector<8x8xf32>
    %cst_20 = arith.constant dense<0xFF800000> : vector<8xf32>
    %31 = vector.multi_reduction <maximumf>, %30, %cst_20 [1] : vector<8x8xf32> to vector<8xf32>
    %32 = vector.shape_cast %31 : vector<8xf32> to vector<8x1xf32>
    %33 = vector.broadcast %32 : vector<8x1xf32> to vector<8x8xf32>
    %34 = arith.subf %30, %33 : vector<8x8xf32>
    %35 = math.exp %34 : vector<8x8xf32>
    %cst_21 = arith.constant dense<0.000000e+00> : vector<8xf32>
    %36 = vector.multi_reduction <add>, %35, %cst_21 [1] : vector<8x8xf32> to vector<8xf32>
    %37 = vector.shape_cast %36 : vector<8xf32> to vector<8x1xf32>
    %cst_22 = arith.constant dense<0.000000e+00> : vector<8x32xf32>
    %38 = tpu.matmul %35, %26, %cst_22 {dimension_numbers = #tpu.dot_dimension_numbers<[1], [0], [0], [1], [0, 0, 1, 1], [], []>} : vector<8x8xf32>, vector<8x32xf32>, vector<8x32xf32> -> vector<8x32xf32>
    %39 = tpu.reciprocal %37 : vector<8x1xf32> -> vector<8x1xf32>
    %40 = vector.broadcast %39 : vector<8x1xf32> to vector<8x32xf32>
    %41 = arith.mulf %38, %40 : vector<8x32xf32>
    %42 = vector.extract_strided_slice %22 {offsets = [0, 0], sizes = [32, 32], strides = [1, 1]} : vector<128x32xf32> to vector<32x32xf32>
    %cst_23 = arith.constant dense<0.000000e+00> : vector<8x32xf32>
    %43 = tpu.matmul %41, %42, %cst_23 {dimension_numbers = #tpu.dot_dimension_numbers<[1], [0], [0], [1], [0, 0, 1, 1], [], []>} : vector<8x32xf32>, vector<32x32xf32>, vector<8x32xf32> -> vector<8x32xf32>
    %44 = arith.addf %23, %43 : vector<8x32xf32>
    %45 = vector.extract_strided_slice %5 {offsets = [0, 32], sizes = [8, 32], strides = [1, 1]} : vector<8x256xf32> to vector<8x32xf32>
    %46 = vector.extract_strided_slice %7 {offsets = [0, 32], sizes = [8, 32], strides = [1, 1]} : vector<8x256xf32> to vector<8x32xf32>
    %47 = vector.extract_strided_slice %7 {offsets = [0, 160], sizes = [8, 32], strides = [1, 1]} : vector<8x256xf32> to vector<8x32xf32>
    %cst_24 = arith.constant dense<0.000000e+00> : vector<8x8xf32>
    %48 = tpu.matmul %45, %46, %cst_24 {dimension_numbers = #tpu.dot_dimension_numbers<[1], [1], [0], [0], [0, 0, 1, 0], [], []>} : vector<8x32xf32>, vector<8x32xf32>, vector<8x8xf32> -> vector<8x8xf32>
    %49 = vector.broadcast %15 : vector<8x1xf32> to vector<8x8xf32>
    %50 = arith.mulf %49, %48 : vector<8x8xf32>
    %51 = arith.addf %50, %21 : vector<8x8xf32>
    %cst_25 = arith.constant dense<0xFF800000> : vector<8xf32>
    %52 = vector.multi_reduction <maximumf>, %51, %cst_25 [1] : vector<8x8xf32> to vector<8xf32>
    %53 = vector.shape_cast %52 : vector<8xf32> to vector<8x1xf32>
    %54 = vector.broadcast %53 : vector<8x1xf32> to vector<8x8xf32>
    %55 = arith.subf %51, %54 : vector<8x8xf32>
    %56 = math.exp %55 : vector<8x8xf32>
    %cst_26 = arith.constant dense<0.000000e+00> : vector<8xf32>
    %57 = vector.multi_reduction <add>, %56, %cst_26 [1] : vector<8x8xf32> to vector<8xf32>
    %58 = vector.shape_cast %57 : vector<8xf32> to vector<8x1xf32>
    %cst_27 = arith.constant dense<0.000000e+00> : vector<8x32xf32>
    %59 = tpu.matmul %56, %47, %cst_27 {dimension_numbers = #tpu.dot_dimension_numbers<[1], [0], [0], [1], [0, 0, 1, 1], [], []>} : vector<8x8xf32>, vector<8x32xf32>, vector<8x32xf32> -> vector<8x32xf32>
    %60 = tpu.reciprocal %58 : vector<8x1xf32> -> vector<8x1xf32>
    %61 = vector.broadcast %60 : vector<8x1xf32> to vector<8x32xf32>
    %62 = arith.mulf %59, %61 : vector<8x32xf32>
    %63 = vector.extract_strided_slice %22 {offsets = [32, 0], sizes = [32, 32], strides = [1, 1]} : vector<128x32xf32> to vector<32x32xf32>
    %cst_28 = arith.constant dense<0.000000e+00> : vector<8x32xf32>
    %64 = tpu.matmul %62, %63, %cst_28 {dimension_numbers = #tpu.dot_dimension_numbers<[1], [0], [0], [1], [0, 0, 1, 1], [], []>} : vector<8x32xf32>, vector<32x32xf32>, vector<8x32xf32> -> vector<8x32xf32>
    %65 = arith.addf %44, %64 : vector<8x32xf32>
    %66 = vector.extract_strided_slice %5 {offsets = [0, 64], sizes = [8, 32], strides = [1, 1]} : vector<8x256xf32> to vector<8x32xf32>
    %67 = vector.extract_strided_slice %7 {offsets = [0, 64], sizes = [8, 32], strides = [1, 1]} : vector<8x256xf32> to vector<8x32xf32>
    %68 = vector.extract_strided_slice %7 {offsets = [0, 192], sizes = [8, 32], strides = [1, 1]} : vector<8x256xf32> to vector<8x32xf32>
    %cst_29 = arith.constant dense<0.000000e+00> : vector<8x8xf32>
    %69 = tpu.matmul %66, %67, %cst_29 {dimension_numbers = #tpu.dot_dimension_numbers<[1], [1], [0], [0], [0, 0, 1, 0], [], []>} : vector<8x32xf32>, vector<8x32xf32>, vector<8x8xf32> -> vector<8x8xf32>
    %70 = vector.broadcast %15 : vector<8x1xf32> to vector<8x8xf32>
    %71 = arith.mulf %70, %69 : vector<8x8xf32>
    %72 = arith.addf %71, %21 : vector<8x8xf32>
    %cst_30 = arith.constant dense<0xFF800000> : vector<8xf32>
    %73 = vector.multi_reduction <maximumf>, %72, %cst_30 [1] : vector<8x8xf32> to vector<8xf32>
    %74 = vector.shape_cast %73 : vector<8xf32> to vector<8x1xf32>
    %75 = vector.broadcast %74 : vector<8x1xf32> to vector<8x8xf32>
    %76 = arith.subf %72, %75 : vector<8x8xf32>
    %77 = math.exp %76 : vector<8x8xf32>
    %cst_31 = arith.constant dense<0.000000e+00> : vector<8xf32>
    %78 = vector.multi_reduction <add>, %77, %cst_31 [1] : vector<8x8xf32> to vector<8xf32>
    %79 = vector.shape_cast %78 : vector<8xf32> to vector<8x1xf32>
    %cst_32 = arith.constant dense<0.000000e+00> : vector<8x32xf32>
    %80 = tpu.matmul %77, %68, %cst_32 {dimension_numbers = #tpu.dot_dimension_numbers<[1], [0], [0], [1], [0, 0, 1, 1], [], []>} : vector<8x8xf32>, vector<8x32xf32>, vector<8x32xf32> -> vector<8x32xf32>
    %81 = tpu.reciprocal %79 : vector<8x1xf32> -> vector<8x1xf32>
    %82 = vector.broadcast %81 : vector<8x1xf32> to vector<8x32xf32>
    %83 = arith.mulf %80, %82 : vector<8x32xf32>
    %84 = vector.extract_strided_slice %22 {offsets = [64, 0], sizes = [32, 32], strides = [1, 1]} : vector<128x32xf32> to vector<32x32xf32>
    %cst_33 = arith.constant dense<0.000000e+00> : vector<8x32xf32>
    %85 = tpu.matmul %83, %84, %cst_33 {dimension_numbers = #tpu.dot_dimension_numbers<[1], [0], [0], [1], [0, 0, 1, 1], [], []>} : vector<8x32xf32>, vector<32x32xf32>, vector<8x32xf32> -> vector<8x32xf32>
    %86 = arith.addf %65, %85 : vector<8x32xf32>
    %87 = vector.extract_strided_slice %5 {offsets = [0, 96], sizes = [8, 32], strides = [1, 1]} : vector<8x256xf32> to vector<8x32xf32>
    %88 = vector.extract_strided_slice %7 {offsets = [0, 96], sizes = [8, 32], strides = [1, 1]} : vector<8x256xf32> to vector<8x32xf32>
    %89 = vector.extract_strided_slice %7 {offsets = [0, 224], sizes = [8, 32], strides = [1, 1]} : vector<8x256xf32> to vector<8x32xf32>
    %cst_34 = arith.constant dense<0.000000e+00> : vector<8x8xf32>
    %90 = tpu.matmul %87, %88, %cst_34 {dimension_numbers = #tpu.dot_dimension_numbers<[1], [1], [0], [0], [0, 0, 1, 0], [], []>} : vector<8x32xf32>, vector<8x32xf32>, vector<8x8xf32> -> vector<8x8xf32>
    %91 = vector.broadcast %15 : vector<8x1xf32> to vector<8x8xf32>
    %92 = arith.mulf %91, %90 : vector<8x8xf32>
    %93 = arith.addf %92, %21 : vector<8x8xf32>
    %cst_35 = arith.constant dense<0xFF800000> : vector<8xf32>
    %94 = vector.multi_reduction <maximumf>, %93, %cst_35 [1] : vector<8x8xf32> to vector<8xf32>
    %95 = vector.shape_cast %94 : vector<8xf32> to vector<8x1xf32>
    %96 = vector.broadcast %95 : vector<8x1xf32> to vector<8x8xf32>
    %97 = arith.subf %93, %96 : vector<8x8xf32>
    %98 = math.exp %97 : vector<8x8xf32>
    %cst_36 = arith.constant dense<0.000000e+00> : vector<8xf32>
    %99 = vector.multi_reduction <add>, %98, %cst_36 [1] : vector<8x8xf32> to vector<8xf32>
    %100 = vector.shape_cast %99 : vector<8xf32> to vector<8x1xf32>
    %cst_37 = arith.constant dense<0.000000e+00> : vector<8x32xf32>
    %101 = tpu.matmul %98, %89, %cst_37 {dimension_numbers = #tpu.dot_dimension_numbers<[1], [0], [0], [1], [0, 0, 1, 1], [], []>} : vector<8x8xf32>, vector<8x32xf32>, vector<8x32xf32> -> vector<8x32xf32>
    %102 = tpu.reciprocal %100 : vector<8x1xf32> -> vector<8x1xf32>
    %103 = vector.broadcast %102 : vector<8x1xf32> to vector<8x32xf32>
    %104 = arith.mulf %101, %103 : vector<8x32xf32>
    %105 = vector.extract_strided_slice %22 {offsets = [96, 0], sizes = [32, 32], strides = [1, 1]} : vector<128x32xf32> to vector<32x32xf32>
    %cst_38 = arith.constant dense<0.000000e+00> : vector<8x32xf32>
    %106 = tpu.matmul %104, %105, %cst_38 {dimension_numbers = #tpu.dot_dimension_numbers<[1], [0], [0], [1], [0, 0, 1, 1], [], []>} : vector<8x32xf32>, vector<32x32xf32>, vector<8x32xf32> -> vector<8x32xf32>
    %107 = arith.addf %86, %106 : vector<8x32xf32>
    %c0_39 = arith.constant 0 : index
    %c0_40 = arith.constant 0 : index
    %108 = vector.load %arg9[%c0_39, %c0_40] : memref<1x32xf32, #tpu.memory_space<vmem>>, vector<1x32xf32>
    %109 = vector.broadcast %108 : vector<1x32xf32> to vector<8x32xf32>
    %110 = arith.addf %107, %109 : vector<8x32xf32>
    %c0_41 = arith.constant 0 : index
    %c0_42 = arith.constant 0 : index
    %c0_43 = arith.constant 0 : index
    %111 = vector.load %arg10[%c0_41, %c0_42, %c0_43] : memref<1x8x32xf32, #tpu.memory_space<vmem>>, vector<1x8x32xf32>
    %112 = vector.shape_cast %111 : vector<1x8x32xf32> to vector<8x32xf32>
    %113 = vector.shape_cast %110 : vector<8x32xf32> to vector<1x8x32xf32>
    tpu.vector_store %arg10[%c0_41, %c0_42, %c0_43], %113 {strides = array<i32>} : memref<1x8x32xf32, #tpu.memory_space<vmem>>, vector<1x8x32xf32>,
    return
  }
  func.func @transform_0(%arg0: i32, %arg1: i32) -> (i32, i32, i32) {
    %c0_i32 = arith.constant 0 : i32
    %c0_i32_0 = arith.constant 0 : i32
    return %arg0, %arg1, %c0_i32 : i32, i32, i32
  }
  func.func @transform_1(%arg0: i32, %arg1: i32) -> (i32, i32, i32) {
    %c0_i32 = arith.constant 0 : i32
    %c0_i32_0 = arith.constant 0 : i32
    %c0_i32_1 = arith.constant 0 : i32
    return %arg0, %c0_i32, %c0_i32_0 : i32, i32, i32
  }
  func.func @transform_2(%arg0: i32, %arg1: i32) -> (i32, i32, i32) {
    %c0_i32 = arith.constant 0 : i32
    %c0_i32_0 = arith.constant 0 : i32
    return %arg0, %arg1, %c0_i32 : i32, i32, i32
  }
  func.func @transform_3(%arg0: i32, %arg1: i32) -> (i32, i32) {
    %c0_i32 = arith.constant 0 : i32
    %c0_i32_0 = arith.constant 0 : i32
    %c0_i32_1 = arith.constant 0 : i32
    return %c0_i32, %c0_i32_0 : i32, i32
  }
  func.func @transform_4(%arg0: i32, %arg1: i32) -> (i32, i32) {
    %c0_i32 = arith.constant 0 : i32
    %c0_i32_0 = arith.constant 0 : i32
    %c0_i32_1 = arith.constant 0 : i32
    return %c0_i32, %c0_i32_0 : i32, i32
  }
  func.func @transform_5(%arg0: i32, %arg1: i32) -> (i32, i32) {
    %c0_i32 = arith.constant 0 : i32
    %c0_i32_0 = arith.constant 0 : i32
    %c0_i32_1 = arith.constant 0 : i32
    return %c0_i32, %c0_i32_0 : i32, i32
  }
  func.func @transform_6(%arg0: i32, %arg1: i32) -> (i32, i32) {
    %c0_i32 = arith.constant 0 : i32
    %c0_i32_0 = arith.constant 0 : i32
    %c0_i32_1 = arith.constant 0 : i32
    return %c0_i32, %c0_i32_0 : i32, i32
  }
  func.func @transform_7(%arg0: i32, %arg1: i32) -> (i32, i32) {
    %c0_i32 = arith.constant 0 : i32
    %c0_i32_0 = arith.constant 0 : i32
    %c0_i32_1 = arith.constant 0 : i32
    return %c0_i32, %c0_i32_0 : i32, i32
  }
  func.func @transform_8(%arg0: i32, %arg1: i32) -> (i32, i32, i32) {
    %c0_i32 = arith.constant 0 : i32
    %c0_i32_0 = arith.constant 0 : i32
    return %arg0, %arg1, %c0_i32 : i32, i32, i32
  }
}

</mosaic_0001>

<llo_original>
// kernel: tpu_custom_call.1
$region0: #{tpu_custom_call.1}
  #allocation0 [shape = 'u32[]', space=smem, size = 0x4, offset = 0x4, fixed_abs, tag = 'smem constant byte address 0x4 - core index']
  #allocation1 [shape = 'u32[144,128]{1,0:T(1,128)}', space=vmem, size = 0x12000, scoped, tag = 'internal scratch']
  %s0 = inlined_call_operand.vmem [shape: f32[2,8,32], index: 0, kind: input, shape index: {}]
  %s1 = inlined_call_operand.vmem [shape: f32[2,8,32], index: 1, kind: input, shape index: {}]
  %s2 = inlined_call_operand.vmem [shape: s8[2,8,8], index: 2, kind: input, shape index: {}]
  %s3 = inlined_call_operand.vmem [shape: f32[32,256], index: 3, kind: input, shape index: {}]
  %s4 = inlined_call_operand.vmem [shape: f32[32,256], index: 4, kind: input, shape index: {}]
  %s5 = inlined_call_operand.vmem [shape: f32[128,32], index: 5, kind: input, shape index: {}]
  %s6 = inlined_call_operand.vmem [shape: f32[1,2], index: 6, kind: input, shape index: {}]
  %s7 = inlined_call_operand.vmem [shape: f32[1,32], index: 7, kind: input, shape index: {}]
  %s8 = inlined_call_operand.hbm [shape: f32[2,8,32], index: 8, kind: output, shape index: {}]
  %s9 = sld [smem:[#allocation0]]
  $region65: #{tpu_custom_call.1} parent=0
    _
  %s11 = ssub.s32 1, %s9
  %s12 = scalar_select 0, %s11, %s9
  $region1: #{tpu_custom_call.1} parent=0
    #allocation2 [shape = 'u8[8192]{0}', space=vmem, size = 0x2000, scoped, tag = 'output window, operand 0']
    #allocation3 [shape = 's32[2]{0}', space=sflag, size = 0x8, scoped, tag = 'scoped memory for tpu_custom_call.1']
    %13 = vsyncpa [#allocation3], 0
    %s14 = scalar_lea.sflag [#allocation3], 1
    %15 = vsyncpa %s14, 0
    loop: start=0, step=1, limit=4
    $region2: #{tpu_custom_call.1} parent=1 // loop_pre_header
      _
    $region3: #{tpu_custom_call.1} parent=1 // loop_header
      %s17 = sphi 0, %s21
      %p18 = scmp.ge.s32.totalorder %s17, 4
      %s24 = sphi 0, %s36
      %s25 = sphi 0, %s32
      %s26 = sphi 0, %s24
      %s27 = sphi 0, %s25
      %s28 = sphi 0, %s26
      %s29 = sphi 0, %s27
      %s41 = sphi 0, %s43
      %s44 = sphi 0, %s41
      %s45 = sphi 0, %s44
      %s61 = sphi 0, %s45
      %s67 = sphi 0, %s69
      %s70 = sphi 0, %s67
      %s71 = sphi 0, %s70
      %s87 = sphi 0, %s71
      %s95 = sphi 0, %s97
      %s98 = sphi 0, %s95
      %s99 = sphi 0, %s98
      %s115 = sphi 0, %s99
      %s119 = sphi 0, %s119
      %s121 = sphi 0, %s119
      %s122 = sphi 0, %s121
      %s136 = sphi 0, %s122
      %s140 = sphi 0, %s140
      %s142 = sphi 0, %s140
      %s143 = sphi 0, %s142
      %s157 = sphi 0, %s143
      %s161 = sphi 0, %s161
      %s163 = sphi 0, %s161
      %s164 = sphi 0, %s163
      %s178 = sphi 0, %s164
      %s182 = sphi 0, %s182
      %s184 = sphi 0, %s182
      %s185 = sphi 0, %s184
      %s199 = sphi 0, %s185
      %s203 = sphi 0, %s203
      %s205 = sphi 0, %s203
      %s206 = sphi 0, %s205
      %s220 = sphi 0, %s206
      %s228 = sphi 0, %s230
      %s231 = sphi 0, %s228
      %s232 = sphi 0, %s231
      %s248 = sphi 0, %s232
    $region4: #{tpu_custom_call.1} parent=1 // loop_header_branch
      %20 = sbr.rel (%p18) target = $region8
    $region5: #{tpu_custom_call.1} parent=1 // loop_body
      %s22 = ssub.s32 %s17, 1
      %s23 = ssub.s32 %s17, 2
      %s30 = sadd.s32 1, %s25
      %p31 = scmp.ge.s32.totalorder %s30, 1
      %s32 = scalar_select %p31, 0, %s30
      %s33 = sadd.s32 1, %s24
      %s34 = scalar_select %p31, %s33, %s24
      %p35 = scmp.ge.s32.totalorder %s34, 2
      %s36 = scalar_select %p35, 0, %s34
      %s37 = ssub.s32 %s24, %s36
      %s38 = ssub.s32 %s25, %s32
      %s39 = sor.u32 %s37, %s38
      %p40 = scmp.eq.s32.totalorder %s39, 0
      %s42 = sadd.s32 %s41, 1
      %s43 = scalar_select %p40, %s41, %s42
      %p46 = pneg %p40
      %p47 = scmp.eq.s32.totalorder %s17, 1
      %p48 = por %p46, %p47
      %p49 = scmp.ne.s32.totalorder %s41, %s44
      %p50 = scmp.eq.s32.totalorder %s17, 0
      %p51 = por %p49, %p50
      %p52 = scmp.ne.s32.totalorder %s41, %s44
      %p53 = scmp.eq.s32.totalorder %s22, 1
      %p54 = por %p52, %p53
      %p55 = scmp.ne.s32.totalorder %s44, %s45
      %p56 = scmp.eq.s32.totalorder %s22, 0
      %p57 = por %p55, %p56
      %p58 = scmp.ne.s32.totalorder %s44, %s45
      %p59 = scmp.eq.s32.totalorder %s23, 1
      %p60 = por %p58, %p59
      %p62 = scmp.ne.s32.totalorder %s45, %s61
      %p63 = scmp.eq.s32.totalorder %s23, 0
      %p64 = por %p62, %p63
      %s65 = ssub.s32 %s24, %s36
      %p66 = scmp.eq.s32.totalorder %s65, 0
      %s68 = sadd.s32 %s67, 1
      %s69 = scalar_select %p66, %s67, %s68
      %p72 = pneg %p66
      %p73 = scmp.eq.s32.totalorder %s17, 1
      %p74 = por %p72, %p73
      %p75 = scmp.ne.s32.totalorder %s67, %s70
      %p76 = scmp.eq.s32.totalorder %s17, 0
      %p77 = por %p75, %p76
      %p78 = scmp.ne.s32.totalorder %s67, %s70
      %p79 = scmp.eq.s32.totalorder %s22, 1
      %p80 = por %p78, %p79
      %p81 = scmp.ne.s32.totalorder %s70, %s71
      %p82 = scmp.eq.s32.totalorder %s22, 0
      %p83 = por %p81, %p82
      %p84 = scmp.ne.s32.totalorder %s70, %s71
      %p85 = scmp.eq.s32.totalorder %s23, 1
      %p86 = por %p84, %p85
      %p88 = scmp.ne.s32.totalorder %s71, %s87
      %p89 = scmp.eq.s32.totalorder %s23, 0
      %p90 = por %p88, %p89
      %s91 = ssub.s32 %s24, %s36
      %s92 = ssub.s32 %s25, %s32
      %s93 = sor.u32 %s91, %s92
      %p94 = scmp.eq.s32.totalorder %s93, 0
      %s96 = sadd.s32 %s95, 1
      %s97 = scalar_select %p94, %s95, %s96
      %p100 = pneg %p94
      %p101 = scmp.eq.s32.totalorder %s17, 1
      %p102 = por %p100, %p101
      %p103 = scmp.ne.s32.totalorder %s95, %s98
      %p104 = scmp.eq.s32.totalorder %s17, 0
      %p105 = por %p103, %p104
      %p106 = scmp.ne.s32.totalorder %s95, %s98
      %p107 = scmp.eq.s32.totalorder %s22, 1
      %p108 = por %p106, %p107
      %p109 = scmp.ne.s32.totalorder %s98, %s99
      %p110 = scmp.eq.s32.totalorder %s22, 0
      %p111 = por %p109, %p110
      %p112 = scmp.ne.s32.totalorder %s98, %s99
      %p113 = scmp.eq.s32.totalorder %s23, 1
      %p114 = por %p112, %p113
      %p116 = scmp.ne.s32.totalorder %s99, %s115
      %p117 = scmp.eq.s32.totalorder %s23, 0
      %p118 = por %p116, %p117
      %s120 = sadd.s32 %s119, 1
      %p123 = scmp.eq.s32.totalorder %s17, 1
      %p124 = scmp.ne.s32.totalorder %s119, %s121
      %p125 = scmp.eq.s32.totalorder %s17, 0
      %p126 = por %p124, %p125
      %p127 = scmp.ne.s32.totalorder %s119, %s121
      %p128 = scmp.eq.s32.totalorder %s22, 1
      %p129 = por %p127, %p128
      %p130 = scmp.ne.s32.totalorder %s121, %s122
      %p131 = scmp.eq.s32.totalorder %s22, 0
      %p132 = por %p130, %p131
      %p133 = scmp.ne.s32.totalorder %s121, %s122
      %p134 = scmp.eq.s32.totalorder %s23, 1
      %p135 = por %p133, %p134
      %p137 = scmp.ne.s32.totalorder %s122, %s136
      %p138 = scmp.eq.s32.totalorder %s23, 0
      %p139 = por %p137, %p138
      %s141 = sadd.s32 %s140, 1
      %p144 = scmp.eq.s32.totalorder %s17, 1
      %p145 = scmp.ne.s32.totalorder %s140, %s142
      %p146 = scmp.eq.s32.totalorder %s17, 0
      %p147 = por %p145, %p146
      %p148 = scmp.ne.s32.totalorder %s140, %s142
      %p149 = scmp.eq.s32.totalorder %s22, 1
      %p150 = por %p148, %p149
      %p151 = scmp.ne.s32.totalorder %s142, %s143
      %p152 = scmp.eq.s32.totalorder %s22, 0
      %p153 = por %p151, %p152
      %p154 = scmp.ne.s32.totalorder %s142, %s143
      %p155 = scmp.eq.s32.totalorder %s23, 1
      %p156 = por %p154, %p155
      %p158 = scmp.ne.s32.totalorder %s143, %s157
      %p159 = scmp.eq.s32.totalorder %s23, 0
      %p160 = por %p158, %p159
      %s162 = sadd.s32 %s161, 1
      %p165 = scmp.eq.s32.totalorder %s17, 1
      %p166 = scmp.ne.s32.totalorder %s161, %s163
      %p167 = scmp.eq.s32.totalorder %s17, 0
      %p168 = por %p166, %p167
      %p169 = scmp.ne.s32.totalorder %s161, %s163
      %p170 = scmp.eq.s32.totalorder %s22, 1
      %p171 = por %p169, %p170
      %p172 = scmp.ne.s32.totalorder %s163, %s164
      %p173 = scmp.eq.s32.totalorder %s22, 0
      %p174 = por %p172, %p173
      %p175 = scmp.ne.s32.totalorder %s163, %s164
      %p176 = scmp.eq.s32.totalorder %s23, 1
      %p177 = por %p175, %p176
      %p179 = scmp.ne.s32.totalorder %s164, %s178
      %p180 = scmp.eq.s32.totalorder %s23, 0
      %p181 = por %p179, %p180
      %s183 = sadd.s32 %s182, 1
      %p186 = scmp.eq.s32.totalorder %s17, 1
      %p187 = scmp.ne.s32.totalorder %s182, %s184
      %p188 = scmp.eq.s32.totalorder %s17, 0
      %p189 = por %p187, %p188
      %p190 = scmp.ne.s32.totalorder %s182, %s184
      %p191 = scmp.eq.s32.totalorder %s22, 1
      %p192 = por %p190, %p191
      %p193 = scmp.ne.s32.totalorder %s184, %s185
      %p194 = scmp.eq.s32.totalorder %s22, 0
      %p195 = por %p193, %p194
      %p196 = scmp.ne.s32.totalorder %s184, %s185
      %p197 = scmp.eq.s32.totalorder %s23, 1
      %p198 = por %p196, %p197
      %p200 = scmp.ne.s32.totalorder %s185, %s199
      %p201 = scmp.eq.s32.totalorder %s23, 0
      %p202 = por %p200, %p201
      %s204 = sadd.s32 %s203, 1
      %p207 = scmp.eq.s32.totalorder %s17, 1
      %p208 = scmp.ne.s32.totalorder %s203, %s205
      %p209 = scmp.eq.s32.totalorder %s17, 0
      %p210 = por %p208, %p209
      %p211 = scmp.ne.s32.totalorder %s203, %s205
      %p212 = scmp.eq.s32.totalorder %s22, 1
      %p213 = por %p211, %p212
      %p214 = scmp.ne.s32.totalorder %s205, %s206
      %p215 = scmp.eq.s32.totalorder %s22, 0
      %p216 = por %p214, %p215
      %p217 = scmp.ne.s32.totalorder %s205, %s206
      %p218 = scmp.eq.s32.totalorder %s23, 1
      %p219 = por %p217, %p218
      %p221 = scmp.ne.s32.totalorder %s206, %s220
      %p222 = scmp.eq.s32.totalorder %s23, 0
      %p223 = por %p221, %p222
      %s224 = ssub.s32 %s24, %s36
      %s225 = ssub.s32 %s25, %s32
      %s226 = sor.u32 %s224, %s225
      %p227 = scmp.eq.s32.totalorder %s226, 0
      %s229 = sadd.s32 %s228, 1
      %s230 = scalar_select %p227, %s228, %s229
      %p233 = pneg %p227
      %p234 = scmp.eq.s32.totalorder %s17, 1
      %p235 = por %p233, %p234
      %p236 = scmp.ne.s32.totalorder %s228, %s231
      %p237 = scmp.eq.s32.totalorder %s17, 0
      %p238 = por %p236, %p237
      %p239 = scmp.ne.s32.totalorder %s228, %s231
      %p240 = scmp.eq.s32.totalorder %s22, 1
      %p241 = por %p239, %p240
      %p242 = scmp.ne.s32.totalorder %s231, %s232
      %p243 = scmp.eq.s32.totalorder %s22, 0
      %p244 = por %p242, %p243
      %p245 = scmp.ne.s32.totalorder %s231, %s232
      %p246 = scmp.eq.s32.totalorder %s23, 1
      %p247 = por %p245, %p246
      %p249 = scmp.ne.s32.totalorder %s232, %s248
      %p250 = scmp.eq.s32.totalorder %s23, 0
      %p251 = por %p249, %p250
      %p252 = scmp.le.s32.totalorder 1, %s17
      %p253 = scmp.lt.s32.totalorder %s17, 3
      %p254 = pnand %p252, %p253
      %p255 = pneg %p254
      // Predicated region
      $region9: #{tpu_custom_call.1} parent=5 // pred_check
        _
      $region10: #{tpu_custom_call.1} parent=5 // pred_check_branch
        %257 = sbr.rel (%p254) target = $region12
      $region11: #{tpu_custom_call.1} parent=5 // pred_region
        %s258 = ssub.s32 %s17, 1
        // Predicated region
        $region13: #{tpu_custom_call.1} parent=11 // pred_check
          %p259 = pneg %p132
        $region14: #{tpu_custom_call.1} parent=11 // pred_check_branch
          %261 = sbr.rel (%p259) target = $region16
        $region15: #{tpu_custom_call.1} parent=11 // pred_region
          _
        $region16: #{tpu_custom_call.1} parent=11 // pred_fallthru
          _
        // Predicated region
        $region17: #{tpu_custom_call.1} parent=11 // pred_check
          %p262 = pneg %p153
        $region18: #{tpu_custom_call.1} parent=11 // pred_check_branch
          %264 = sbr.rel (%p262) target = $region20
        $region19: #{tpu_custom_call.1} parent=11 // pred_region
          _
        $region20: #{tpu_custom_call.1} parent=11 // pred_fallthru
          _
        // Predicated region
        $region21: #{tpu_custom_call.1} parent=11 // pred_check
          %p265 = pneg %p174
        $region22: #{tpu_custom_call.1} parent=11 // pred_check_branch
          %267 = sbr.rel (%p265) target = $region24
        $region23: #{tpu_custom_call.1} parent=11 // pred_region
          _
        $region24: #{tpu_custom_call.1} parent=11 // pred_fallthru
          _
        // Predicated region
        $region25: #{tpu_custom_call.1} parent=11 // pred_check
          %p268 = pneg %p195
        $region26: #{tpu_custom_call.1} parent=11 // pred_check_branch
          %270 = sbr.rel (%p268) target = $region28
        $region27: #{tpu_custom_call.1} parent=11 // pred_region
          _
        $region28: #{tpu_custom_call.1} parent=11 // pred_fallthru
          _
        // Predicated region
        $region29: #{tpu_custom_call.1} parent=11 // pred_check
          %p271 = pneg %p216
        $region30: #{tpu_custom_call.1} parent=11 // pred_check_branch
          %273 = sbr.rel (%p271) target = $region32
        $region31: #{tpu_custom_call.1} parent=11 // pred_region
          _
        $region32: #{tpu_custom_call.1} parent=11 // pred_fallthru
          _
      $region12: #{tpu_custom_call.1} parent=5 // pred_fallthru
        _
      %p274 = scmp.lt.s32.totalorder %s17, 2
      // Predicated region
      $region33: #{tpu_custom_call.1} parent=5 // pred_check
        %p275 = pneg %p274
      $region34: #{tpu_custom_call.1} parent=5 // pred_check_branch
        %277 = sbr.rel (%p275) target = $region36
      $region35: #{tpu_custom_call.1} parent=5 // pred_region
        // Predicated region
        $region37: #{tpu_custom_call.1} parent=35 // pred_check
          %p278 = pneg %p51
        $region38: #{tpu_custom_call.1} parent=35 // pred_check_branch
          %280 = sbr.rel (%p278) target = $region40
        $region39: #{tpu_custom_call.1} parent=35 // pred_region
          %p281 = scmp.lt.s32.totalorder %s24, 1
          %s282 = scalar_select %p281, %s24, 1
          %p283 = scmp.lt.s32.totalorder %s25, 0
          %s284 = scalar_select %p283, %s25, 0
          %s285 = sadd.s32 %s284, %s282
          %s286 = smul.addr %s285, 8
          %s287 = scalar_lea.vmem %s0, %s286
        $region40: #{tpu_custom_call.1} parent=35 // pred_fallthru
          _
        // Predicated region
        $region41: #{tpu_custom_call.1} parent=35 // pred_check
          %p288 = pneg %p77
        $region42: #{tpu_custom_call.1} parent=35 // pred_check_branch
          %290 = sbr.rel (%p288) target = $region44
        $region43: #{tpu_custom_call.1} parent=35 // pred_region
          %p291 = scmp.lt.s32.totalorder %s24, 1
          %s292 = scalar_select %p291, %s24, 1
          %s293 = smul.addr %s292, 8
          %s294 = scalar_lea.vmem %s1, %s293
        $region44: #{tpu_custom_call.1} parent=35 // pred_fallthru
          _
        // Predicated region
        $region45: #{tpu_custom_call.1} parent=35 // pred_check
          %p295 = pneg %p105
        $region46: #{tpu_custom_call.1} parent=35 // pred_check_branch
          %297 = sbr.rel (%p295) target = $region48
        $region47: #{tpu_custom_call.1} parent=35 // pred_region
          %p298 = scmp.lt.s32.totalorder %s24, 1
          %s299 = scalar_select %p298, %s24, 1
          %p300 = scmp.lt.s32.totalorder %s25, 0
          %s301 = scalar_select %p300, %s25, 0
          %s302 = sadd.s32 %s301, %s299
          %s303 = smul.addr %s302, 2
          %s304 = scalar_lea.vmem %s2, %s303
        $region48: #{tpu_custom_call.1} parent=35 // pred_fallthru
          _
      $region36: #{tpu_custom_call.1} parent=5 // pred_fallthru
        _
      %p305 = scmp.le.s32.totalorder 1, %s17
      %p306 = scmp.lt.s32.totalorder %s17, 3
      %p307 = pnand %p305, %p306
      %p308 = pneg %p307
      // Predicated region
      $region49: #{tpu_custom_call.1} parent=5 // pred_check
        _
      $region50: #{tpu_custom_call.1} parent=5 // pred_check_branch
        %310 = sbr.rel (%p307) target = $region52
      $region51: #{tpu_custom_call.1} parent=5 // pred_region
        %s311 = ssub.s32 %s17, 1
        %p312 = scmp.lt.s32.totalorder %s26, 1
        %s313 = scalar_select %p312, %s26, 1
        %p314 = scmp.lt.s32.totalorder %s27, 0
        %s315 = scalar_select %p314, %s27, 0
        %s316 = sadd.s32 %s315, %s313
        %s317 = smul.addr %s316, 8
        %s318 = scalar_lea.vmem %s0, %s317
        %p319 = pneg %p57
        %p320 = pneg %p54
        %p321 = scmp.lt.s32.totalorder %s26, 1
        %s322 = scalar_select %p321, %s26, 1
        %s323 = smul.addr %s322, 8
        %s324 = scalar_lea.vmem %s1, %s323
        %p325 = pneg %p83
        %p326 = pneg %p80
        %p327 = scmp.lt.s32.totalorder %s26, 1
        %s328 = scalar_select %p327, %s26, 1
        %p329 = scmp.lt.s32.totalorder %s27, 0
        %s330 = scalar_select %p329, %s27, 0
        %s331 = sadd.s32 %s330, %s328
        %s332 = smul.addr %s331, 2
        %s333 = scalar_lea.vmem %s2, %s332
        %p334 = pneg %p111
        %p335 = pneg %p108
        %p336 = pneg %p132
        %p337 = pneg %p129
        %p338 = pneg %p153
        %p339 = pneg %p150
        %p340 = pneg %p174
        %p341 = pneg %p171
        %p342 = pneg %p195
        %p343 = pneg %p192
        %p344 = pneg %p216
        %p345 = pneg %p213
        %p346 = pneg %p244
        %p347 = pneg %p241
        %s348 = sand.u32 %s231, 1
        %s349 = scalar_lea.sflag [#allocation3], %s348
        %s350 = sand.u32 %s231, 1
        %s351 = smul.addr %s350, 8
        %s352 = scalar_lea.vmem [#allocation2], %s351
        %p353 = scmp.lt.s32.totalorder %s26, 1
        %s354 = scalar_select %p353, %s26, 1
        %p355 = scmp.lt.s32.totalorder %s27, 0
        %s356 = scalar_select %p355, %s27, 0
        %s357 = sadd.s32 %s356, %s354
        %s358 = smul.addr %s357, 8
        %s359 = scalar_lea.vmem %s0, %s358
        %p360 = scmp.lt.s32.totalorder %s26, 1
        %s361 = scalar_select %p360, %s26, 1
        %s362 = smul.addr %s361, 8
        %s363 = scalar_lea.vmem %s1, %s362
        %p364 = scmp.lt.s32.totalorder %s26, 1
        %s365 = scalar_select %p364, %s26, 1
        %p366 = scmp.lt.s32.totalorder %s27, 0
        %s367 = scalar_select %p366, %s27, 0
        %s368 = sadd.s32 %s367, %s365
        %s369 = smul.addr %s368, 2
        %s370 = scalar_lea.vmem %s2, %s369
        %v371 = vld [vmem:[%s359] sm:$0xff]
        %v372 = vld [vmem:[%s363] sm:$0xff]
        %v373 = vld [vmem:[%s3] sm:$0xff]
        %v374 = vld [vmem:[%s3 + $0x8] sm:$0xff]
        %v375 = vld [vmem:[%s3 + $0x10] sm:$0xff]
        %v376 = vld [vmem:[%s3 + $0x18] sm:$0xff]
        %v377 = vld [vmem:[%s3 + $0x20] sm:$0xff]
        %v378 = vld [vmem:[%s3 + $0x28] sm:$0xff]
        %v379 = vld [vmem:[%s3 + $0x30] sm:$0xff]
        %v380 = vld [vmem:[%s3 + $0x38] sm:$0xff]
        %vm381 = vcmask 261120
        %v383 = vsel %vm381, %v371, 0
        %385 = vmatprep.subr.mxu0 %v374
        %386 = vmatpush1.msra.mxu0 %v373
        %387 = vmatprep.subr.mxu0 %v376
        %388 = vmatpush1.msra.mxu0 %v375
        %389 = vmatprep.subr.mxu0 %v378
        %390 = vmatpush1.msra.mxu0 %v377
        %391 = vmatprep.subr.mxu0 %v380
        %392 = vmatpush1.msra.mxu0 %v379
        %393 = vmatprep.subr.mxu0 0.0
        %394 = vmatpush1.msra.mxu0 0.0
        %395 = vmatprep.subr.mxu0 0.0
        %396 = vmatpush1.msra.mxu0 0.0
        %397 = vmatprep.subr.mxu0 0.0
        %398 = vmatpush1.msra.mxu0 0.0
        %399 = vmatprep.subr.mxu0 0.0
        %400 = vmatpush1.msra.mxu0 0.0
        %401 = vmatprep.subr.mxu0 0.0
        %402 = vmatpush1.msra.mxu0 0.0
        %403 = vmatprep.subr.mxu0 0.0
        %404 = vmatpush1.msra.mxu0 0.0
        %405 = vmatprep.subr.mxu0 0.0
        %406 = vmatpush1.msra.mxu0 0.0
        %407 = vmatprep.subr.mxu0 0.0
        %408 = vmatpush1.msra.mxu0 0.0
        %409 = vmatprep.subr.mxu0 0.0
        %410 = vmatpush1.msra.mxu0 0.0
        %411 = vmatprep.subr.mxu0 0.0
        %412 = vmatpush1.msra.mxu0 0.0
        %413 = vmatprep.subr.mxu0 0.0
        %414 = vmatpush1.msra.mxu0 0.0
        %415 = vmatprep.subr.mxu0 0.0
        %416 = vmatpush1.msra.mxu0 0.0
        %417 = vmatprep.subr.mxu0 0.0
        %418 = vmatpush1.msra.mxu0 0.0
        %419 = vmatprep.subr.mxu0 0.0
        %420 = vmatpush1.msra.mxu0 0.0
        %421 = vmatprep.subr.mxu0 0.0
        %422 = vmatpush1.msra.mxu0 0.0
        %423 = vmatprep.subr.mxu0 0.0
        %424 = vmatpush1.msra.mxu0 0.0
        %425 = vmatprep.subr.mxu0 0.0
        %426 = vmatpush1.msra.mxu0 0.0
        %427 = vmatprep.subr.mxu0 0.0
        %428 = vmatpush1.msra.mxu0 0.0
        %429 = vmatprep.subr.mxu0 0.0
        %430 = vmatpush1.msra.mxu0 0.0
        %431 = vmatprep.subr.mxu0 0.0
        %432 = vmatpush1.msra.mxu0 0.0
        %433 = vmatprep.subr.mxu0 0.0
        %434 = vmatpush1.msra.mxu0 0.0
        %435 = vmatprep.subr.mxu0 0.0
        %436 = vmatpush1.msra.mxu0 0.0
        %437 = vmatprep.subr.mxu0 0.0
        %438 = vmatpush1.msra.mxu0 0.0
        %439 = vmatprep.subr.mxu0 0.0
        %440 = vmatpush1.msra.mxu0 0.0
        %441 = vmatprep.subr.mxu0 0.0
        %442 = vmatpush1.msra.mxu0 0.0
        %443 = vmatprep.subr.mxu0 0.0
        %444 = vmatpush1.msra.mxu0 0.0
        %445 = vmatprep.subr.mxu0 0.0
        %446 = vmatpush1.msra.mxu0 0.0
        %447 = vmatprep.subr.mxu0 0.0
        %448 = vmatpush1.msra.mxu0 0.0
        %449 = vmatprep.mubr.f32.mxu0 0.0
        %450 = vmatmul.mubr.f32.gmra.mrb[0].mxu0 %v383
        %v451 = vpop.f32.mrb[0].mxu0
        %v452 = vadd.f32 0.0, %v451
        %v453 = vpop.f32.mrb[0].mxu0
        %v454 = vadd.f32 0.0, %v453
        %455 = vdwg.mxu0
        %v456 = vld [vmem:[%s4] sm:$0xff]
        %v457 = vld [vmem:[%s4 + $0x8] sm:$0xff]
        %v458 = vld [vmem:[%s4 + $0x10] sm:$0xff]
        %v459 = vld [vmem:[%s4 + $0x18] sm:$0xff]
        %v460 = vld [vmem:[%s4 + $0x20] sm:$0xff]
        %v461 = vld [vmem:[%s4 + $0x28] sm:$0xff]
        %v462 = vld [vmem:[%s4 + $0x30] sm:$0xff]
        %v463 = vld [vmem:[%s4 + $0x38] sm:$0xff]
        %v465 = vsel %vm381, %v372, 0
        %467 = vmatprep.subr.mxu0 %v457
        %468 = vmatpush1.msra.mxu0 %v456
        %469 = vmatprep.subr.mxu0 %v459
        %470 = vmatpush1.msra.mxu0 %v458
        %471 = vmatprep.subr.mxu0 %v461
        %472 = vmatpush1.msra.mxu0 %v460
        %473 = vmatprep.subr.mxu0 %v463
        %474 = vmatpush1.msra.mxu0 %v462
        %475 = vmatprep.subr.mxu0 0.0
        %476 = vmatpush1.msra.mxu0 0.0
        %477 = vmatprep.subr.mxu0 0.0
        %478 = vmatpush1.msra.mxu0 0.0
        %479 = vmatprep.subr.mxu0 0.0
        %480 = vmatpush1.msra.mxu0 0.0
        %481 = vmatprep.subr.mxu0 0.0
        %482 = vmatpush1.msra.mxu0 0.0
        %483 = vmatprep.subr.mxu0 0.0
        %484 = vmatpush1.msra.mxu0 0.0
        %485 = vmatprep.subr.mxu0 0.0
        %486 = vmatpush1.msra.mxu0 0.0
        %487 = vmatprep.subr.mxu0 0.0
        %488 = vmatpush1.msra.mxu0 0.0
        %489 = vmatprep.subr.mxu0 0.0
        %490 = vmatpush1.msra.mxu0 0.0
        %491 = vmatprep.subr.mxu0 0.0
        %492 = vmatpush1.msra.mxu0 0.0
        %493 = vmatprep.subr.mxu0 0.0
        %494 = vmatpush1.msra.mxu0 0.0
        %495 = vmatprep.subr.mxu0 0.0
        %496 = vmatpush1.msra.mxu0 0.0
        %497 = vmatprep.subr.mxu0 0.0
        %498 = vmatpush1.msra.mxu0 0.0
        %499 = vmatprep.subr.mxu0 0.0
        %500 = vmatpush1.msra.mxu0 0.0
        %501 = vmatprep.subr.mxu0 0.0
        %502 = vmatpush1.msra.mxu0 0.0
        %503 = vmatprep.subr.mxu0 0.0
        %504 = vmatpush1.msra.mxu0 0.0
        %505 = vmatprep.subr.mxu0 0.0
        %506 = vmatpush1.msra.mxu0 0.0
        %507 = vmatprep.subr.mxu0 0.0
        %508 = vmatpush1.msra.mxu0 0.0
        %509 = vmatprep.subr.mxu0 0.0
        %510 = vmatpush1.msra.mxu0 0.0
        %511 = vmatprep.subr.mxu0 0.0
        %512 = vmatpush1.msra.mxu0 0.0
        %513 = vmatprep.subr.mxu0 0.0
        %514 = vmatpush1.msra.mxu0 0.0
        %515 = vmatprep.subr.mxu0 0.0
        %516 = vmatpush1.msra.mxu0 0.0
        %517 = vmatprep.subr.mxu0 0.0
        %518 = vmatpush1.msra.mxu0 0.0
        %519 = vmatprep.subr.mxu0 0.0
        %520 = vmatpush1.msra.mxu0 0.0
        %521 = vmatprep.subr.mxu0 0.0
        %522 = vmatpush1.msra.mxu0 0.0
        %523 = vmatprep.subr.mxu0 0.0
        %524 = vmatpush1.msra.mxu0 0.0
        %525 = vmatprep.subr.mxu0 0.0
        %526 = vmatpush1.msra.mxu0 0.0
        %527 = vmatprep.subr.mxu0 0.0
        %528 = vmatpush1.msra.mxu0 0.0
        %529 = vmatprep.subr.mxu0 0.0
        %530 = vmatpush1.msra.mxu0 0.0
        %531 = vmatprep.mubr.f32.mxu0 0.0
        %532 = vmatmul.mubr.f32.gmra.mrb[0].mxu0 %v465
        %v533 = vpop.f32.mrb[0].mxu0
        %v534 = vadd.f32 0.0, %v533
        %v535 = vpop.f32.mrb[0].mxu0
        %v536 = vadd.f32 0.0, %v535
        %537 = vdwg.mxu0
        %v538 = vld [vmem:[%s6] sm:$0x1]
        %v540 = vlaneseq
        %v541 = vshrl.u32 %v540, 7
        %v542 = vsub.s32 0, %v541
        %v543 = vrot.slane %v538, %v542
        %v545 = vadd.f32 %v454, %v543
        %v546 = vmul.f32 %v545, 1.442695
        %v547 = vpow.pop %v546
        %v548 = vmul.f32 %v547, 0.17677669
        %v549 = vld [vmem:[%s370] sm:$0x3]
        %v550 = vunpack.c.0.s8 %v549
        %v551 = vcvt.s32.f32 %v550
        %553 = vset.pattern.permute.xlu0 1
        %554 = vperm.xlu0 %553, %v547
        %v555 = vpop.permute.xlu0 %554
        %v557 = vmul.f32 %v555, %v551
        %v558 = vld [vmem:[%s5] sm:$0xff]
        %v559 = vld [vmem:[%s5 + $0x8] sm:$0xff]
        %v560 = vld [vmem:[%s5 + $0x10] sm:$0xff]
        %v561 = vld [vmem:[%s5 + $0x18] sm:$0xff]
        %v562 = vld [vmem:[%s5 + $0x20] sm:$0xff]
        %v563 = vld [vmem:[%s5 + $0x28] sm:$0xff]
        %v564 = vld [vmem:[%s5 + $0x30] sm:$0xff]
        %v565 = vld [vmem:[%s5 + $0x38] sm:$0xff]
        %v566 = vld [vmem:[%s5 + $0x40] sm:$0xff]
        %v567 = vld [vmem:[%s5 + $0x48] sm:$0xff]
        %v568 = vld [vmem:[%s5 + $0x50] sm:$0xff]
        %v569 = vld [vmem:[%s5 + $0x58] sm:$0xff]
        %v570 = vld [vmem:[%s5 + $0x60] sm:$0xff]
        %v571 = vld [vmem:[%s5 + $0x68] sm:$0xff]
        %v572 = vld [vmem:[%s5 + $0x70] sm:$0xff]
        %v573 = vld [vmem:[%s5 + $0x78] sm:$0xff]
        %v575 = vsel %vm381, %v452, 0
        %v578 = vsel %vm381, %v534, 0
        %580 = vmatprep.subr.mxu0 0.0
        %581 = vmatpush1.xpose.msra.mxu0 %v578
        %582 = vmatprep.subr.mxu0 0.0
        %583 = vmatpush1.xpose.msra.mxu0 0.0
        %584 = vmatprep.subr.mxu0 0.0
        %585 = vmatpush1.xpose.msra.mxu0 0.0
        %586 = vmatprep.subr.mxu0 0.0
        %587 = vmatpush1.xpose.msra.mxu0 0.0
        %588 = vmatprep.subr.mxu0 0.0
        %589 = vmatpush1.xpose.msra.mxu0 0.0
        %590 = vmatprep.subr.mxu0 0.0
        %591 = vmatpush1.xpose.msra.mxu0 0.0
        %592 = vmatprep.subr.mxu0 0.0
        %593 = vmatpush1.xpose.msra.mxu0 0.0
        %594 = vmatprep.subr.mxu0 0.0
        %595 = vmatpush1.xpose.msra.mxu0 0.0
        %596 = vmatprep.subr.mxu0 0.0
        %597 = vmatpush1.xpose.msra.mxu0 0.0
        %598 = vmatprep.subr.mxu0 0.0
        %599 = vmatpush1.xpose.msra.mxu0 0.0
        %600 = vmatprep.subr.mxu0 0.0
        %601 = vmatpush1.xpose.msra.mxu0 0.0
        %602 = vmatprep.subr.mxu0 0.0
        %603 = vmatpush1.xpose.msra.mxu0 0.0
        %604 = vmatprep.subr.mxu0 0.0
        %605 = vmatpush1.xpose.msra.mxu0 0.0
        %606 = vmatprep.subr.mxu0 0.0
        %607 = vmatpush1.xpose.msra.mxu0 0.0
        %608 = vmatprep.subr.mxu0 0.0
        %609 = vmatpush1.xpose.msra.mxu0 0.0
        %610 = vmatprep.subr.mxu0 0.0
        %611 = vmatpush1.xpose.msra.mxu0 0.0
        %612 = vmatprep.subr.mxu0 0.0
        %613 = vmatpush1.xpose.msra.mxu0 0.0
        %614 = vmatprep.subr.mxu0 0.0
        %615 = vmatpush1.xpose.msra.mxu0 0.0
        %616 = vmatprep.subr.mxu0 0.0
        %617 = vmatpush1.xpose.msra.mxu0 0.0
        %618 = vmatprep.subr.mxu0 0.0
        %619 = vmatpush1.xpose.msra.mxu0 0.0
        %620 = vmatprep.subr.mxu0 0.0
        %621 = vmatpush1.xpose.msra.mxu0 0.0
        %622 = vmatprep.subr.mxu0 0.0
        %623 = vmatpush1.xpose.msra.mxu0 0.0
        %624 = vmatprep.subr.mxu0 0.0
        %625 = vmatpush1.xpose.msra.mxu0 0.0
        %626 = vmatprep.subr.mxu0 0.0
        %627 = vmatpush1.xpose.msra.mxu0 0.0
        %628 = vmatprep.subr.mxu0 0.0
        %629 = vmatpush1.xpose.msra.mxu0 0.0
        %630 = vmatprep.subr.mxu0 0.0
        %631 = vmatpush1.xpose.msra.mxu0 0.0
        %632 = vmatprep.subr.mxu0 0.0
        %633 = vmatpush1.xpose.msra.mxu0 0.0
        %634 = vmatprep.subr.mxu0 0.0
        %635 = vmatpush1.xpose.msra.mxu0 0.0
        %636 = vmatprep.subr.mxu0 0.0
        %637 = vmatpush1.xpose.msra.mxu0 0.0
        %638 = vmatprep.subr.mxu0 0.0
        %639 = vmatpush1.xpose.msra.mxu0 0.0
        %640 = vmatprep.subr.mxu0 0.0
        %641 = vmatpush1.xpose.msra.mxu0 0.0
        %642 = vmatprep.subr.mxu0 0.0
        %643 = vmatpush1.xpose.msra.mxu0 0.0
        %644 = vmatprep.mubr.f32.mxu0 0.0
        %645 = vmatmul.mubr.f32.gmra.mrb[0].mxu0 %v575
        %v646 = vpop.f32.mrb[0].mxu0
        %v647 = vadd.f32 0.0, %v646
        %v648 = vpop.f32.mrb[0].mxu0
        %649 = vdwg.mxu0
        %651 = vset.pattern.permute.xlu0 0
        %652 = vperm.xlu0 %651, %v548
        %v653 = vpop.permute.xlu0 %652
        %v655 = vmul.f32 %v653, %v647
        %v656 = vadd.f32 %v655, %v557
        %vm657 = vcmask 64512
        %v658 = vsel %vm657, %v656, -inf
        %659 = vmax.xlane.f32.xlu0 %v658
        %v660 = vpop.xlane.xlu0 %659
        %v661 = vsub.f32 %v656, %v660
        %v662 = vmul.f32 %v661, 1.442695
        %v663 = vpow.pop %v662
        %v664 = vsel %vm657, %v663, 0.0
        %665 = vadd.xlane.f32.xlu0 %v664
        %v666 = vpop.xlane.xlu0 %665
        %v668 = vsel %vm657, %v663, 0
        %670 = vmatprep.subr.mxu0 0.0
        %671 = vmatpush1.msra.mxu0 %v536
        %672 = vmatprep.subr.mxu0 0.0
        %673 = vmatpush1.msra.mxu0 0.0
        %674 = vmatprep.subr.mxu0 0.0
        %675 = vmatpush1.msra.mxu0 0.0
        %676 = vmatprep.subr.mxu0 0.0
        %677 = vmatpush1.msra.mxu0 0.0
        %678 = vmatprep.subr.mxu0 0.0
        %679 = vmatpush1.msra.mxu0 0.0
        %680 = vmatprep.subr.mxu0 0.0
        %681 = vmatpush1.msra.mxu0 0.0
        %682 = vmatprep.subr.mxu0 0.0
        %683 = vmatpush1.msra.mxu0 0.0
        %684 = vmatprep.subr.mxu0 0.0
        %685 = vmatpush1.msra.mxu0 0.0
        %686 = vmatprep.subr.mxu0 0.0
        %687 = vmatpush1.msra.mxu0 0.0
        %688 = vmatprep.subr.mxu0 0.0
        %689 = vmatpush1.msra.mxu0 0.0
        %690 = vmatprep.subr.mxu0 0.0
        %691 = vmatpush1.msra.mxu0 0.0
        %692 = vmatprep.subr.mxu0 0.0
        %693 = vmatpush1.msra.mxu0 0.0
        %694 = vmatprep.subr.mxu0 0.0
        %695 = vmatpush1.msra.mxu0 0.0
        %696 = vmatprep.subr.mxu0 0.0
        %697 = vmatpush1.msra.mxu0 0.0
        %698 = vmatprep.subr.mxu0 0.0
        %699 = vmatpush1.msra.mxu0 0.0
        %700 = vmatprep.subr.mxu0 0.0
        %701 = vmatpush1.msra.mxu0 0.0
        %702 = vmatprep.subr.mxu0 0.0
        %703 = vmatpush1.msra.mxu0 0.0
        %704 = vmatprep.subr.mxu0 0.0
        %705 = vmatpush1.msra.mxu0 0.0
        %706 = vmatprep.subr.mxu0 0.0
        %707 = vmatpush1.msra.mxu0 0.0
        %708 = vmatprep.subr.mxu0 0.0
        %709 = vmatpush1.msra.mxu0 0.0
        %710 = vmatprep.subr.mxu0 0.0
        %711 = vmatpush1.msra.mxu0 0.0
        %712 = vmatprep.subr.mxu0 0.0
        %713 = vmatpush1.msra.mxu0 0.0
        %714 = vmatprep.subr.mxu0 0.0
        %715 = vmatpush1.msra.mxu0 0.0
        %716 = vmatprep.subr.mxu0 0.0
        %717 = vmatpush1.msra.mxu0 0.0
        %718 = vmatprep.subr.mxu0 0.0
        %719 = vmatpush1.msra.mxu0 0.0
        %720 = vmatprep.subr.mxu0 0.0
        %721 = vmatpush1.msra.mxu0 0.0
        %722 = vmatprep.subr.mxu0 0.0
        %723 = vmatpush1.msra.mxu0 0.0
        %724 = vmatprep.subr.mxu0 0.0
        %725 = vmatpush1.msra.mxu0 0.0
        %726 = vmatprep.subr.mxu0 0.0
        %727 = vmatpush1.msra.mxu0 0.0
        %728 = vmatprep.subr.mxu0 0.0
        %729 = vmatpush1.msra.mxu0 0.0
        %730 = vmatprep.subr.mxu0 0.0
        %731 = vmatpush1.msra.mxu0 0.0
        %732 = vmatprep.subr.mxu0 0.0
        %733 = vmatpush1.msra.mxu0 0.0
        %734 = vmatprep.mubr.f32.mxu0 0.0
        %735 = vmatmul.mubr.f32.gmra.mrb[0].mxu0 %v668
        %v736 = vpop.f32.mrb[0].mxu0
        %v737 = vadd.f32 0.0, %v736
        %v738 = vpop.f32.mrb[0].mxu0
        %739 = vdwg.mxu0
        %v740 = vrcp.pop %v666
        %v741 = vmul.f32 %v737, %v740
        %742 = vrot.lane.b32.xlu0 %v452, 96
        %v743 = vpop.permute.xlu0 %742
        %744 = vrot.lane.b32.xlu0 %v534, 96
        %v745 = vpop.permute.xlu0 %744
        %v746 = vsel %vm381, %v743, 0
        %v748 = vsel %vm381, %v745, 0
        %750 = vmatprep.subr.mxu0 0.0
        %751 = vmatpush1.xpose.msra.mxu0 %v748
        %752 = vmatprep.subr.mxu0 0.0
        %753 = vmatpush1.xpose.msra.mxu0 0.0
        %754 = vmatprep.subr.mxu0 0.0
        %755 = vmatpush1.xpose.msra.mxu0 0.0
        %756 = vmatprep.subr.mxu0 0.0
        %757 = vmatpush1.xpose.msra.mxu0 0.0
        %758 = vmatprep.subr.mxu0 0.0
        %759 = vmatpush1.xpose.msra.mxu0 0.0
        %760 = vmatprep.subr.mxu0 0.0
        %761 = vmatpush1.xpose.msra.mxu0 0.0
        %762 = vmatprep.subr.mxu0 0.0
        %763 = vmatpush1.xpose.msra.mxu0 0.0
        %764 = vmatprep.subr.mxu0 0.0
        %765 = vmatpush1.xpose.msra.mxu0 0.0
        %766 = vmatprep.subr.mxu0 0.0
        %767 = vmatpush1.xpose.msra.mxu0 0.0
        %768 = vmatprep.subr.mxu0 0.0
        %769 = vmatpush1.xpose.msra.mxu0 0.0
        %770 = vmatprep.subr.mxu0 0.0
        %771 = vmatpush1.xpose.msra.mxu0 0.0
        %772 = vmatprep.subr.mxu0 0.0
        %773 = vmatpush1.xpose.msra.mxu0 0.0
        %774 = vmatprep.subr.mxu0 0.0
        %775 = vmatpush1.xpose.msra.mxu0 0.0
        %776 = vmatprep.subr.mxu0 0.0
        %777 = vmatpush1.xpose.msra.mxu0 0.0
        %778 = vmatprep.subr.mxu0 0.0
        %779 = vmatpush1.xpose.msra.mxu0 0.0
        %780 = vmatprep.subr.mxu0 0.0
        %781 = vmatpush1.xpose.msra.mxu0 0.0
        %782 = vmatprep.subr.mxu0 0.0
        %783 = vmatpush1.xpose.msra.mxu0 0.0
        %784 = vmatprep.subr.mxu0 0.0
        %785 = vmatpush1.xpose.msra.mxu0 0.0
        %786 = vmatprep.subr.mxu0 0.0
        %787 = vmatpush1.xpose.msra.mxu0 0.0
        %788 = vmatprep.subr.mxu0 0.0
        %789 = vmatpush1.xpose.msra.mxu0 0.0
        %790 = vmatprep.subr.mxu0 0.0
        %791 = vmatpush1.xpose.msra.mxu0 0.0
        %792 = vmatprep.subr.mxu0 0.0
        %793 = vmatpush1.xpose.msra.mxu0 0.0
        %794 = vmatprep.subr.mxu0 0.0
        %795 = vmatpush1.xpose.msra.mxu0 0.0
        %796 = vmatprep.subr.mxu0 0.0
        %797 = vmatpush1.xpose.msra.mxu0 0.0
        %798 = vmatprep.subr.mxu0 0.0
        %799 = vmatpush1.xpose.msra.mxu0 0.0
        %800 = vmatprep.subr.mxu0 0.0
        %801 = vmatpush1.xpose.msra.mxu0 0.0
        %802 = vmatprep.subr.mxu0 0.0
        %803 = vmatpush1.xpose.msra.mxu0 0.0
        %804 = vmatprep.subr.mxu0 0.0
        %805 = vmatpush1.xpose.msra.mxu0 0.0
        %806 = vmatprep.subr.mxu0 0.0
        %807 = vmatpush1.xpose.msra.mxu0 0.0
        %808 = vmatprep.subr.mxu0 0.0
        %809 = vmatpush1.xpose.msra.mxu0 0.0
        %810 = vmatprep.subr.mxu0 0.0
        %811 = vmatpush1.xpose.msra.mxu0 0.0
        %812 = vmatprep.subr.mxu0 0.0
        %813 = vmatpush1.xpose.msra.mxu0 0.0
        %814 = vmatprep.mubr.f32.mxu0 0.0
        %815 = vmatmul.mubr.f32.gmra.mrb[0].mxu0 %v746
        %v816 = vpop.f32.mrb[0].mxu0
        %v817 = vadd.f32 0.0, %v816
        %v818 = vpop.f32.mrb[0].mxu0
        %819 = vdwg.mxu0
        %v820 = vmul.f32 %v653, %v817
        %v821 = vadd.f32 %v820, %v557
        %v822 = vsel %vm657, %v821, -inf
        %823 = vmax.xlane.f32.xlu0 %v822
        %v824 = vpop.xlane.xlu0 %823
        %v825 = vsub.f32 %v821, %v824
        %v826 = vmul.f32 %v825, 1.442695
        %v827 = vpow.pop %v826
        %v828 = vsel %vm657, %v827, 0.0
        %829 = vadd.xlane.f32.xlu0 %v828
        %v830 = vpop.xlane.xlu0 %829
        %832 = vrot.lane.b32.xlu0 %v536, 96
        %v833 = vpop.permute.xlu0 %832
        %v836 = vsel %vm657, %v827, 0
        %838 = vmatprep.subr.mxu0 0.0
        %839 = vmatpush1.msra.mxu0 %v833
        %840 = vmatprep.subr.mxu0 0.0
        %841 = vmatpush1.msra.mxu0 0.0
        %842 = vmatprep.subr.mxu0 0.0
        %843 = vmatpush1.msra.mxu0 0.0
        %844 = vmatprep.subr.mxu0 0.0
        %845 = vmatpush1.msra.mxu0 0.0
        %846 = vmatprep.subr.mxu0 0.0
        %847 = vmatpush1.msra.mxu0 0.0
        %848 = vmatprep.subr.mxu0 0.0
        %849 = vmatpush1.msra.mxu0 0.0
        %850 = vmatprep.subr.mxu0 0.0
        %851 = vmatpush1.msra.mxu0 0.0
        %852 = vmatprep.subr.mxu0 0.0
        %853 = vmatpush1.msra.mxu0 0.0
        %854 = vmatprep.subr.mxu0 0.0
        %855 = vmatpush1.msra.mxu0 0.0
        %856 = vmatprep.subr.mxu0 0.0
        %857 = vmatpush1.msra.mxu0 0.0
        %858 = vmatprep.subr.mxu0 0.0
        %859 = vmatpush1.msra.mxu0 0.0
        %860 = vmatprep.subr.mxu0 0.0
        %861 = vmatpush1.msra.mxu0 0.0
        %862 = vmatprep.subr.mxu0 0.0
        %863 = vmatpush1.msra.mxu0 0.0
        %864 = vmatprep.subr.mxu0 0.0
        %865 = vmatpush1.msra.mxu0 0.0
        %866 = vmatprep.subr.mxu0 0.0
        %867 = vmatpush1.msra.mxu0 0.0
        %868 = vmatprep.subr.mxu0 0.0
        %869 = vmatpush1.msra.mxu0 0.0
        %870 = vmatprep.subr.mxu0 0.0
        %871 = vmatpush1.msra.mxu0 0.0
        %872 = vmatprep.subr.mxu0 0.0
        %873 = vmatpush1.msra.mxu0 0.0
        %874 = vmatprep.subr.mxu0 0.0
        %875 = vmatpush1.msra.mxu0 0.0
        %876 = vmatprep.subr.mxu0 0.0
        %877 = vmatpush1.msra.mxu0 0.0
        %878 = vmatprep.subr.mxu0 0.0
        %879 = vmatpush1.msra.mxu0 0.0
        %880 = vmatprep.subr.mxu0 0.0
        %881 = vmatpush1.msra.mxu0 0.0
        %882 = vmatprep.subr.mxu0 0.0
        %883 = vmatpush1.msra.mxu0 0.0
        %884 = vmatprep.subr.mxu0 0.0
        %885 = vmatpush1.msra.mxu0 0.0
        %886 = vmatprep.subr.mxu0 0.0
        %887 = vmatpush1.msra.mxu0 0.0
        %888 = vmatprep.subr.mxu0 0.0
        %889 = vmatpush1.msra.mxu0 0.0
        %890 = vmatprep.subr.mxu0 0.0
        %891 = vmatpush1.msra.mxu0 0.0
        %892 = vmatprep.subr.mxu0 0.0
        %893 = vmatpush1.msra.mxu0 0.0
        %894 = vmatprep.subr.mxu0 0.0
        %895 = vmatpush1.msra.mxu0 0.0
        %896 = vmatprep.subr.mxu0 0.0
        %897 = vmatpush1.msra.mxu0 0.0
        %898 = vmatprep.subr.mxu0 0.0
        %899 = vmatpush1.msra.mxu0 0.0
        %900 = vmatprep.subr.mxu0 0.0
        %901 = vmatpush1.msra.mxu0 0.0
        %902 = vmatprep.mubr.f32.mxu0 0.0
        %903 = vmatmul.mubr.f32.gmra.mrb[0].mxu0 %v836
        %v904 = vpop.f32.mrb[0].mxu0
        %v905 = vadd.f32 0.0, %v904
        %v906 = vpop.f32.mrb[0].mxu0
        %907 = vdwg.mxu0
        %v908 = vrcp.pop %v830
        %v909 = vmul.f32 %v905, %v908
        %v911 = vsel %vm381, %v909, 0
        %913 = vmatprep.subr.mxu0 0.0
        %914 = vmatpush1.msra.mxu0 %v562
        %915 = vmatprep.subr.mxu0 0.0
        %916 = vmatpush1.msra.mxu0 %v563
        %917 = vmatprep.subr.mxu0 0.0
        %918 = vmatpush1.msra.mxu0 %v564
        %919 = vmatprep.subr.mxu0 0.0
        %920 = vmatpush1.msra.mxu0 %v565
        %921 = vmatprep.subr.mxu0 0.0
        %922 = vmatpush1.msra.mxu0 0.0
        %923 = vmatprep.subr.mxu0 0.0
        %924 = vmatpush1.msra.mxu0 0.0
        %925 = vmatprep.subr.mxu0 0.0
        %926 = vmatpush1.msra.mxu0 0.0
        %927 = vmatprep.subr.mxu0 0.0
        %928 = vmatpush1.msra.mxu0 0.0
        %929 = vmatprep.subr.mxu0 0.0
        %930 = vmatpush1.msra.mxu0 0.0
        %931 = vmatprep.subr.mxu0 0.0
        %932 = vmatpush1.msra.mxu0 0.0
        %933 = vmatprep.subr.mxu0 0.0
        %934 = vmatpush1.msra.mxu0 0.0
        %935 = vmatprep.subr.mxu0 0.0
        %936 = vmatpush1.msra.mxu0 0.0
        %937 = vmatprep.subr.mxu0 0.0
        %938 = vmatpush1.msra.mxu0 0.0
        %939 = vmatprep.subr.mxu0 0.0
        %940 = vmatpush1.msra.mxu0 0.0
        %941 = vmatprep.subr.mxu0 0.0
        %942 = vmatpush1.msra.mxu0 0.0
        %943 = vmatprep.subr.mxu0 0.0
        %944 = vmatpush1.msra.mxu0 0.0
        %945 = vmatprep.subr.mxu0 0.0
        %946 = vmatpush1.msra.mxu0 0.0
        %947 = vmatprep.subr.mxu0 0.0
        %948 = vmatpush1.msra.mxu0 0.0
        %949 = vmatprep.subr.mxu0 0.0
        %950 = vmatpush1.msra.mxu0 0.0
        %951 = vmatprep.subr.mxu0 0.0
        %952 = vmatpush1.msra.mxu0 0.0
        %953 = vmatprep.subr.mxu0 0.0
        %954 = vmatpush1.msra.mxu0 0.0
        %955 = vmatprep.subr.mxu0 0.0
        %956 = vmatpush1.msra.mxu0 0.0
        %957 = vmatprep.subr.mxu0 0.0
        %958 = vmatpush1.msra.mxu0 0.0
        %959 = vmatprep.subr.mxu0 0.0
        %960 = vmatpush1.msra.mxu0 0.0
        %961 = vmatprep.subr.mxu0 0.0
        %962 = vmatpush1.msra.mxu0 0.0
        %963 = vmatprep.subr.mxu0 0.0
        %964 = vmatpush1.msra.mxu0 0.0
        %965 = vmatprep.subr.mxu0 0.0
        %966 = vmatpush1.msra.mxu0 0.0
        %967 = vmatprep.subr.mxu0 0.0
        %968 = vmatpush1.msra.mxu0 0.0
        %969 = vmatprep.subr.mxu0 0.0
        %970 = vmatpush1.msra.mxu0 0.0
        %971 = vmatprep.subr.mxu0 0.0
        %972 = vmatpush1.msra.mxu0 0.0
        %973 = vmatprep.subr.mxu0 0.0
        %974 = vmatpush1.msra.mxu0 0.0
        %975 = vmatprep.subr.mxu0 0.0
        %976 = vmatpush1.msra.mxu0 0.0
        %977 = vmatprep.mubr.f32.mxu0 0.0
        %978 = vmatmul.mubr.f32.gmra.mrb[0].mxu0 %v911
        %v979 = vpop.f32.mrb[0].mxu0
        %v980 = vadd.f32 0.0, %v979
        %v981 = vpop.f32.mrb[0].mxu0
        %982 = vdwg.mxu0
        %v984 = vsel %vm381, %v741, 0
        %986 = vmatprep.subr.mxu0 0.0
        %987 = vmatpush1.msra.mxu0 %v558
        %988 = vmatprep.subr.mxu0 0.0
        %989 = vmatpush1.msra.mxu0 %v559
        %990 = vmatprep.subr.mxu0 0.0
        %991 = vmatpush1.msra.mxu0 %v560
        %992 = vmatprep.subr.mxu0 0.0
        %993 = vmatpush1.msra.mxu0 %v561
        %994 = vmatprep.subr.mxu0 0.0
        %995 = vmatpush1.msra.mxu0 0.0
        %996 = vmatprep.subr.mxu0 0.0
        %997 = vmatpush1.msra.mxu0 0.0
        %998 = vmatprep.subr.mxu0 0.0
        %999 = vmatpush1.msra.mxu0 0.0
        %1000 = vmatprep.subr.mxu0 0.0
        %1001 = vmatpush1.msra.mxu0 0.0
        %1002 = vmatprep.subr.mxu0 0.0
        %1003 = vmatpush1.msra.mxu0 0.0
        %1004 = vmatprep.subr.mxu0 0.0
        %1005 = vmatpush1.msra.mxu0 0.0
        %1006 = vmatprep.subr.mxu0 0.0
        %1007 = vmatpush1.msra.mxu0 0.0
        %1008 = vmatprep.subr.mxu0 0.0
        %1009 = vmatpush1.msra.mxu0 0.0
        %1010 = vmatprep.subr.mxu0 0.0
        %1011 = vmatpush1.msra.mxu0 0.0
        %1012 = vmatprep.subr.mxu0 0.0
        %1013 = vmatpush1.msra.mxu0 0.0
        %1014 = vmatprep.subr.mxu0 0.0
        %1015 = vmatpush1.msra.mxu0 0.0
        %1016 = vmatprep.subr.mxu0 0.0
        %1017 = vmatpush1.msra.mxu0 0.0
        %1018 = vmatprep.subr.mxu0 0.0
        %1019 = vmatpush1.msra.mxu0 0.0
        %1020 = vmatprep.subr.mxu0 0.0
        %1021 = vmatpush1.msra.mxu0 0.0
        %1022 = vmatprep.subr.mxu0 0.0
        %1023 = vmatpush1.msra.mxu0 0.0
        %1024 = vmatprep.subr.mxu0 0.0
        %1025 = vmatpush1.msra.mxu0 0.0
        %1026 = vmatprep.subr.mxu0 0.0
        %1027 = vmatpush1.msra.mxu0 0.0
        %1028 = vmatprep.subr.mxu0 0.0
        %1029 = vmatpush1.msra.mxu0 0.0
        %1030 = vmatprep.subr.mxu0 0.0
        %1031 = vmatpush1.msra.mxu0 0.0
        %1032 = vmatprep.subr.mxu0 0.0
        %1033 = vmatpush1.msra.mxu0 0.0
        %1034 = vmatprep.subr.mxu0 0.0
        %1035 = vmatpush1.msra.mxu0 0.0
        %1036 = vmatprep.subr.mxu0 0.0
        %1037 = vmatpush1.msra.mxu0 0.0
        %1038 = vmatprep.subr.mxu0 0.0
        %1039 = vmatpush1.msra.mxu0 0.0
        %1040 = vmatprep.subr.mxu0 0.0
        %1041 = vmatpush1.msra.mxu0 0.0
        %1042 = vmatprep.subr.mxu0 0.0
        %1043 = vmatpush1.msra.mxu0 0.0
        %1044 = vmatprep.subr.mxu0 0.0
        %1045 = vmatpush1.msra.mxu0 0.0
        %1046 = vmatprep.subr.mxu0 0.0
        %1047 = vmatpush1.msra.mxu0 0.0
        %1048 = vmatprep.subr.mxu0 0.0
        %1049 = vmatpush1.msra.mxu0 0.0
        %1050 = vmatprep.mubr.f32.mxu0 0.0
        %1051 = vmatmul.mubr.f32.gmra.mrb[0].mxu0 %v984
        %v1052 = vpop.f32.mrb[0].mxu0
        %v1053 = vadd.f32 %v980, %v1052
        %v1054 = vpop.f32.mrb[0].mxu0
        %1055 = vdwg.mxu0
        %1056 = vrot.lane.b32.xlu0 %v452, 64
        %v1057 = vpop.permute.xlu0 %1056
        %1058 = vrot.lane.b32.xlu0 %v534, 64
        %v1059 = vpop.permute.xlu0 %1058
        %v1060 = vsel %vm381, %v1057, 0
        %v1062 = vsel %vm381, %v1059, 0
        %1064 = vmatprep.subr.mxu0 0.0
        %1065 = vmatpush1.xpose.msra.mxu0 %v1062
        %1066 = vmatprep.subr.mxu0 0.0
        %1067 = vmatpush1.xpose.msra.mxu0 0.0
        %1068 = vmatprep.subr.mxu0 0.0
        %1069 = vmatpush1.xpose.msra.mxu0 0.0
        %1070 = vmatprep.subr.mxu0 0.0
        %1071 = vmatpush1.xpose.msra.mxu0 0.0
        %1072 = vmatprep.subr.mxu0 0.0
        %1073 = vmatpush1.xpose.msra.mxu0 0.0
        %1074 = vmatprep.subr.mxu0 0.0
        %1075 = vmatpush1.xpose.msra.mxu0 0.0
        %1076 = vmatprep.subr.mxu0 0.0
        %1077 = vmatpush1.xpose.msra.mxu0 0.0
        %1078 = vmatprep.subr.mxu0 0.0
        %1079 = vmatpush1.xpose.msra.mxu0 0.0
        %1080 = vmatprep.subr.mxu0 0.0
        %1081 = vmatpush1.xpose.msra.mxu0 0.0
        %1082 = vmatprep.subr.mxu0 0.0
        %1083 = vmatpush1.xpose.msra.mxu0 0.0
        %1084 = vmatprep.subr.mxu0 0.0
        %1085 = vmatpush1.xpose.msra.mxu0 0.0
        %1086 = vmatprep.subr.mxu0 0.0
        %1087 = vmatpush1.xpose.msra.mxu0 0.0
        %1088 = vmatprep.subr.mxu0 0.0
        %1089 = vmatpush1.xpose.msra.mxu0 0.0
        %1090 = vmatprep.subr.mxu0 0.0
        %1091 = vmatpush1.xpose.msra.mxu0 0.0
        %1092 = vmatprep.subr.mxu0 0.0
        %1093 = vmatpush1.xpose.msra.mxu0 0.0
        %1094 = vmatprep.subr.mxu0 0.0
        %1095 = vmatpush1.xpose.msra.mxu0 0.0
        %1096 = vmatprep.subr.mxu0 0.0
        %1097 = vmatpush1.xpose.msra.mxu0 0.0
        %1098 = vmatprep.subr.mxu0 0.0
        %1099 = vmatpush1.xpose.msra.mxu0 0.0
        %1100 = vmatprep.subr.mxu0 0.0
        %1101 = vmatpush1.xpose.msra.mxu0 0.0
        %1102 = vmatprep.subr.mxu0 0.0
        %1103 = vmatpush1.xpose.msra.mxu0 0.0
        %1104 = vmatprep.subr.mxu0 0.0
        %1105 = vmatpush1.xpose.msra.mxu0 0.0
        %1106 = vmatprep.subr.mxu0 0.0
        %1107 = vmatpush1.xpose.msra.mxu0 0.0
        %1108 = vmatprep.subr.mxu0 0.0
        %1109 = vmatpush1.xpose.msra.mxu0 0.0
        %1110 = vmatprep.subr.mxu0 0.0
        %1111 = vmatpush1.xpose.msra.mxu0 0.0
        %1112 = vmatprep.subr.mxu0 0.0
        %1113 = vmatpush1.xpose.msra.mxu0 0.0
        %1114 = vmatprep.subr.mxu0 0.0
        %1115 = vmatpush1.xpose.msra.mxu0 0.0
        %1116 = vmatprep.subr.mxu0 0.0
        %1117 = vmatpush1.xpose.msra.mxu0 0.0
        %1118 = vmatprep.subr.mxu0 0.0
        %1119 = vmatpush1.xpose.msra.mxu0 0.0
        %1120 = vmatprep.subr.mxu0 0.0
        %1121 = vmatpush1.xpose.msra.mxu0 0.0
        %1122 = vmatprep.subr.mxu0 0.0
        %1123 = vmatpush1.xpose.msra.mxu0 0.0
        %1124 = vmatprep.subr.mxu0 0.0
        %1125 = vmatpush1.xpose.msra.mxu0 0.0
        %1126 = vmatprep.subr.mxu0 0.0
        %1127 = vmatpush1.xpose.msra.mxu0 0.0
        %1128 = vmatprep.mubr.f32.mxu0 0.0
        %1129 = vmatmul.mubr.f32.gmra.mrb[0].mxu0 %v1060
        %v1130 = vpop.f32.mrb[0].mxu0
        %v1131 = vadd.f32 0.0, %v1130
        %v1132 = vpop.f32.mrb[0].mxu0
        %1133 = vdwg.mxu0
        %v1134 = vmul.f32 %v653, %v1131
        %v1135 = vadd.f32 %v1134, %v557
        %v1136 = vsel %vm657, %v1135, -inf
        %1137 = vmax.xlane.f32.xlu0 %v1136
        %v1138 = vpop.xlane.xlu0 %1137
        %v1139 = vsub.f32 %v1135, %v1138
        %v1140 = vmul.f32 %v1139, 1.442695
        %v1141 = vpow.pop %v1140
        %v1142 = vsel %vm657, %v1141, 0.0
        %1143 = vadd.xlane.f32.xlu0 %v1142
        %v1144 = vpop.xlane.xlu0 %1143
        %1145 = vrot.lane.b32.xlu0 %v536, 64
        %v1146 = vpop.permute.xlu0 %1145
        %v1149 = vsel %vm657, %v1141, 0
        %1151 = vmatprep.subr.mxu0 0.0
        %1152 = vmatpush1.msra.mxu0 %v1146
        %1153 = vmatprep.subr.mxu0 0.0
        %1154 = vmatpush1.msra.mxu0 0.0
        %1155 = vmatprep.subr.mxu0 0.0
        %1156 = vmatpush1.msra.mxu0 0.0
        %1157 = vmatprep.subr.mxu0 0.0
        %1158 = vmatpush1.msra.mxu0 0.0
        %1159 = vmatprep.subr.mxu0 0.0
        %1160 = vmatpush1.msra.mxu0 0.0
        %1161 = vmatprep.subr.mxu0 0.0
        %1162 = vmatpush1.msra.mxu0 0.0
        %1163 = vmatprep.subr.mxu0 0.0
        %1164 = vmatpush1.msra.mxu0 0.0
        %1165 = vmatprep.subr.mxu0 0.0
        %1166 = vmatpush1.msra.mxu0 0.0
        %1167 = vmatprep.subr.mxu0 0.0
        %1168 = vmatpush1.msra.mxu0 0.0
        %1169 = vmatprep.subr.mxu0 0.0
        %1170 = vmatpush1.msra.mxu0 0.0
        %1171 = vmatprep.subr.mxu0 0.0
        %1172 = vmatpush1.msra.mxu0 0.0
        %1173 = vmatprep.subr.mxu0 0.0
        %1174 = vmatpush1.msra.mxu0 0.0
        %1175 = vmatprep.subr.mxu0 0.0
        %1176 = vmatpush1.msra.mxu0 0.0
        %1177 = vmatprep.subr.mxu0 0.0
        %1178 = vmatpush1.msra.mxu0 0.0
        %1179 = vmatprep.subr.mxu0 0.0
        %1180 = vmatpush1.msra.mxu0 0.0
        %1181 = vmatprep.subr.mxu0 0.0
        %1182 = vmatpush1.msra.mxu0 0.0
        %1183 = vmatprep.subr.mxu0 0.0
        %1184 = vmatpush1.msra.mxu0 0.0
        %1185 = vmatprep.subr.mxu0 0.0
        %1186 = vmatpush1.msra.mxu0 0.0
        %1187 = vmatprep.subr.mxu0 0.0
        %1188 = vmatpush1.msra.mxu0 0.0
        %1189 = vmatprep.subr.mxu0 0.0
        %1190 = vmatpush1.msra.mxu0 0.0
        %1191 = vmatprep.subr.mxu0 0.0
        %1192 = vmatpush1.msra.mxu0 0.0
        %1193 = vmatprep.subr.mxu0 0.0
        %1194 = vmatpush1.msra.mxu0 0.0
        %1195 = vmatprep.subr.mxu0 0.0
        %1196 = vmatpush1.msra.mxu0 0.0
        %1197 = vmatprep.subr.mxu0 0.0
        %1198 = vmatpush1.msra.mxu0 0.0
        %1199 = vmatprep.subr.mxu0 0.0
        %1200 = vmatpush1.msra.mxu0 0.0
        %1201 = vmatprep.subr.mxu0 0.0
        %1202 = vmatpush1.msra.mxu0 0.0
        %1203 = vmatprep.subr.mxu0 0.0
        %1204 = vmatpush1.msra.mxu0 0.0
        %1205 = vmatprep.subr.mxu0 0.0
        %1206 = vmatpush1.msra.mxu0 0.0
        %1207 = vmatprep.subr.mxu0 0.0
        %1208 = vmatpush1.msra.mxu0 0.0
        %1209 = vmatprep.subr.mxu0 0.0
        %1210 = vmatpush1.msra.mxu0 0.0
        %1211 = vmatprep.subr.mxu0 0.0
        %1212 = vmatpush1.msra.mxu0 0.0
        %1213 = vmatprep.subr.mxu0 0.0
        %1214 = vmatpush1.msra.mxu0 0.0
        %1215 = vmatprep.mubr.f32.mxu0 0.0
        %1216 = vmatmul.mubr.f32.gmra.mrb[0].mxu0 %v1149
        %v1217 = vpop.f32.mrb[0].mxu0
        %v1218 = vadd.f32 0.0, %v1217
        %v1219 = vpop.f32.mrb[0].mxu0
        %1220 = vdwg.mxu0
        %v1221 = vrcp.pop %v1144
        %v1222 = vmul.f32 %v1218, %v1221
        %v1224 = vsel %vm381, %v1222, 0
        %1226 = vmatprep.subr.mxu0 0.0
        %1227 = vmatpush1.msra.mxu0 %v566
        %1228 = vmatprep.subr.mxu0 0.0
        %1229 = vmatpush1.msra.mxu0 %v567
        %1230 = vmatprep.subr.mxu0 0.0
        %1231 = vmatpush1.msra.mxu0 %v568
        %1232 = vmatprep.subr.mxu0 0.0
        %1233 = vmatpush1.msra.mxu0 %v569
        %1234 = vmatprep.subr.mxu0 0.0
        %1235 = vmatpush1.msra.mxu0 0.0
        %1236 = vmatprep.subr.mxu0 0.0
        %1237 = vmatpush1.msra.mxu0 0.0
        %1238 = vmatprep.subr.mxu0 0.0
        %1239 = vmatpush1.msra.mxu0 0.0
        %1240 = vmatprep.subr.mxu0 0.0
        %1241 = vmatpush1.msra.mxu0 0.0
        %1242 = vmatprep.subr.mxu0 0.0
        %1243 = vmatpush1.msra.mxu0 0.0
        %1244 = vmatprep.subr.mxu0 0.0
        %1245 = vmatpush1.msra.mxu0 0.0
        %1246 = vmatprep.subr.mxu0 0.0
        %1247 = vmatpush1.msra.mxu0 0.0
        %1248 = vmatprep.subr.mxu0 0.0
        %1249 = vmatpush1.msra.mxu0 0.0
        %1250 = vmatprep.subr.mxu0 0.0
        %1251 = vmatpush1.msra.mxu0 0.0
        %1252 = vmatprep.subr.mxu0 0.0
        %1253 = vmatpush1.msra.mxu0 0.0
        %1254 = vmatprep.subr.mxu0 0.0
        %1255 = vmatpush1.msra.mxu0 0.0
        %1256 = vmatprep.subr.mxu0 0.0
        %1257 = vmatpush1.msra.mxu0 0.0
        %1258 = vmatprep.subr.mxu0 0.0
        %1259 = vmatpush1.msra.mxu0 0.0
        %1260 = vmatprep.subr.mxu0 0.0
        %1261 = vmatpush1.msra.mxu0 0.0
        %1262 = vmatprep.subr.mxu0 0.0
        %1263 = vmatpush1.msra.mxu0 0.0
        %1264 = vmatprep.subr.mxu0 0.0
        %1265 = vmatpush1.msra.mxu0 0.0
        %1266 = vmatprep.subr.mxu0 0.0
        %1267 = vmatpush1.msra.mxu0 0.0
        %1268 = vmatprep.subr.mxu0 0.0
        %1269 = vmatpush1.msra.mxu0 0.0
        %1270 = vmatprep.subr.mxu0 0.0
        %1271 = vmatpush1.msra.mxu0 0.0
        %1272 = vmatprep.subr.mxu0 0.0
        %1273 = vmatpush1.msra.mxu0 0.0
        %1274 = vmatprep.subr.mxu0 0.0
        %1275 = vmatpush1.msra.mxu0 0.0
        %1276 = vmatprep.subr.mxu0 0.0
        %1277 = vmatpush1.msra.mxu0 0.0
        %1278 = vmatprep.subr.mxu0 0.0
        %1279 = vmatpush1.msra.mxu0 0.0
        %1280 = vmatprep.subr.mxu0 0.0
        %1281 = vmatpush1.msra.mxu0 0.0
        %1282 = vmatprep.subr.mxu0 0.0
        %1283 = vmatpush1.msra.mxu0 0.0
        %1284 = vmatprep.subr.mxu0 0.0
        %1285 = vmatpush1.msra.mxu0 0.0
        %1286 = vmatprep.subr.mxu0 0.0
        %1287 = vmatpush1.msra.mxu0 0.0
        %1288 = vmatprep.subr.mxu0 0.0
        %1289 = vmatpush1.msra.mxu0 0.0
        %1290 = vmatprep.mubr.f32.mxu0 0.0
        %1291 = vmatmul.mubr.f32.gmra.mrb[0].mxu0 %v1224
        %v1292 = vpop.f32.mrb[0].mxu0
        %v1293 = vadd.f32 0.0, %v1292
        %v1294 = vpop.f32.mrb[0].mxu0
        %1295 = vdwg.mxu0
        %v1296 = vadd.f32 %v1053, %v1293
        %1297 = vrot.lane.b32.xlu0 %v452, 32
        %v1298 = vpop.permute.xlu0 %1297
        %1299 = vrot.lane.b32.xlu0 %v534, 32
        %v1300 = vpop.permute.xlu0 %1299
        %v1301 = vsel %vm381, %v1298, 0
        %v1303 = vsel %vm381, %v1300, 0
        %1305 = vmatprep.subr.mxu0 0.0
        %1306 = vmatpush1.xpose.msra.mxu0 %v1303
        %1307 = vmatprep.subr.mxu0 0.0
        %1308 = vmatpush1.xpose.msra.mxu0 0.0
        %1309 = vmatprep.subr.mxu0 0.0
        %1310 = vmatpush1.xpose.msra.mxu0 0.0
        %1311 = vmatprep.subr.mxu0 0.0
        %1312 = vmatpush1.xpose.msra.mxu0 0.0
        %1313 = vmatprep.subr.mxu0 0.0
        %1314 = vmatpush1.xpose.msra.mxu0 0.0
        %1315 = vmatprep.subr.mxu0 0.0
        %1316 = vmatpush1.xpose.msra.mxu0 0.0
        %1317 = vmatprep.subr.mxu0 0.0
        %1318 = vmatpush1.xpose.msra.mxu0 0.0
        %1319 = vmatprep.subr.mxu0 0.0
        %1320 = vmatpush1.xpose.msra.mxu0 0.0
        %1321 = vmatprep.subr.mxu0 0.0
        %1322 = vmatpush1.xpose.msra.mxu0 0.0
        %1323 = vmatprep.subr.mxu0 0.0
        %1324 = vmatpush1.xpose.msra.mxu0 0.0
        %1325 = vmatprep.subr.mxu0 0.0
        %1326 = vmatpush1.xpose.msra.mxu0 0.0
        %1327 = vmatprep.subr.mxu0 0.0
        %1328 = vmatpush1.xpose.msra.mxu0 0.0
        %1329 = vmatprep.subr.mxu0 0.0
        %1330 = vmatpush1.xpose.msra.mxu0 0.0
        %1331 = vmatprep.subr.mxu0 0.0
        %1332 = vmatpush1.xpose.msra.mxu0 0.0
        %1333 = vmatprep.subr.mxu0 0.0
        %1334 = vmatpush1.xpose.msra.mxu0 0.0
        %1335 = vmatprep.subr.mxu0 0.0
        %1336 = vmatpush1.xpose.msra.mxu0 0.0
        %1337 = vmatprep.subr.mxu0 0.0
        %1338 = vmatpush1.xpose.msra.mxu0 0.0
        %1339 = vmatprep.subr.mxu0 0.0
        %1340 = vmatpush1.xpose.msra.mxu0 0.0
        %1341 = vmatprep.subr.mxu0 0.0
        %1342 = vmatpush1.xpose.msra.mxu0 0.0
        %1343 = vmatprep.subr.mxu0 0.0
        %1344 = vmatpush1.xpose.msra.mxu0 0.0
        %1345 = vmatprep.subr.mxu0 0.0
        %1346 = vmatpush1.xpose.msra.mxu0 0.0
        %1347 = vmatprep.subr.mxu0 0.0
        %1348 = vmatpush1.xpose.msra.mxu0 0.0
        %1349 = vmatprep.subr.mxu0 0.0
        %1350 = vmatpush1.xpose.msra.mxu0 0.0
        %1351 = vmatprep.subr.mxu0 0.0
        %1352 = vmatpush1.xpose.msra.mxu0 0.0
        %1353 = vmatprep.subr.mxu0 0.0
        %1354 = vmatpush1.xpose.msra.mxu0 0.0
        %1355 = vmatprep.subr.mxu0 0.0
        %1356 = vmatpush1.xpose.msra.mxu0 0.0
        %1357 = vmatprep.subr.mxu0 0.0
        %1358 = vmatpush1.xpose.msra.mxu0 0.0
        %1359 = vmatprep.subr.mxu0 0.0
        %1360 = vmatpush1.xpose.msra.mxu0 0.0
        %1361 = vmatprep.subr.mxu0 0.0
        %1362 = vmatpush1.xpose.msra.mxu0 0.0
        %1363 = vmatprep.subr.mxu0 0.0
        %1364 = vmatpush1.xpose.msra.mxu0 0.0
        %1365 = vmatprep.subr.mxu0 0.0
        %1366 = vmatpush1.xpose.msra.mxu0 0.0
        %1367 = vmatprep.subr.mxu0 0.0
        %1368 = vmatpush1.xpose.msra.mxu0 0.0
        %1369 = vmatprep.mubr.f32.mxu0 0.0
        %1370 = vmatmul.mubr.f32.gmra.mrb[0].mxu0 %v1301
        %v1371 = vpop.f32.mrb[0].mxu0
        %v1372 = vadd.f32 0.0, %v1371
        %v1373 = vpop.f32.mrb[0].mxu0
        %1374 = vdwg.mxu0
        %v1375 = vmul.f32 %v653, %v1372
        %v1376 = vadd.f32 %v1375, %v557
        %v1377 = vsel %vm657, %v1376, -inf
        %1378 = vmax.xlane.f32.xlu0 %v1377
        %v1379 = vpop.xlane.xlu0 %1378
        %v1380 = vsub.f32 %v1376, %v1379
        %v1381 = vmul.f32 %v1380, 1.442695
        %v1382 = vpow.pop %v1381
        %v1383 = vsel %vm657, %v1382, 0.0
        %1384 = vadd.xlane.f32.xlu0 %v1383
        %v1385 = vpop.xlane.xlu0 %1384
        %1386 = vrot.lane.b32.xlu0 %v536, 32
        %v1387 = vpop.permute.xlu0 %1386
        %v1390 = vsel %vm657, %v1382, 0
        %1392 = vmatprep.subr.mxu0 0.0
        %1393 = vmatpush1.msra.mxu0 %v1387
        %1394 = vmatprep.subr.mxu0 0.0
        %1395 = vmatpush1.msra.mxu0 0.0
        %1396 = vmatprep.subr.mxu0 0.0
        %1397 = vmatpush1.msra.mxu0 0.0
        %1398 = vmatprep.subr.mxu0 0.0
        %1399 = vmatpush1.msra.mxu0 0.0
        %1400 = vmatprep.subr.mxu0 0.0
        %1401 = vmatpush1.msra.mxu0 0.0
        %1402 = vmatprep.subr.mxu0 0.0
        %1403 = vmatpush1.msra.mxu0 0.0
        %1404 = vmatprep.subr.mxu0 0.0
        %1405 = vmatpush1.msra.mxu0 0.0
        %1406 = vmatprep.subr.mxu0 0.0
        %1407 = vmatpush1.msra.mxu0 0.0
        %1408 = vmatprep.subr.mxu0 0.0
        %1409 = vmatpush1.msra.mxu0 0.0
        %1410 = vmatprep.subr.mxu0 0.0
        %1411 = vmatpush1.msra.mxu0 0.0
        %1412 = vmatprep.subr.mxu0 0.0
        %1413 = vmatpush1.msra.mxu0 0.0
        %1414 = vmatprep.subr.mxu0 0.0
        %1415 = vmatpush1.msra.mxu0 0.0
        %1416 = vmatprep.subr.mxu0 0.0
        %1417 = vmatpush1.msra.mxu0 0.0
        %1418 = vmatprep.subr.mxu0 0.0
        %1419 = vmatpush1.msra.mxu0 0.0
        %1420 = vmatprep.subr.mxu0 0.0
        %1421 = vmatpush1.msra.mxu0 0.0
        %1422 = vmatprep.subr.mxu0 0.0
        %1423 = vmatpush1.msra.mxu0 0.0
        %1424 = vmatprep.subr.mxu0 0.0
        %1425 = vmatpush1.msra.mxu0 0.0
        %1426 = vmatprep.subr.mxu0 0.0
        %1427 = vmatpush1.msra.mxu0 0.0
        %1428 = vmatprep.subr.mxu0 0.0
        %1429 = vmatpush1.msra.mxu0 0.0
        %1430 = vmatprep.subr.mxu0 0.0
        %1431 = vmatpush1.msra.mxu0 0.0
        %1432 = vmatprep.subr.mxu0 0.0
        %1433 = vmatpush1.msra.mxu0 0.0
        %1434 = vmatprep.subr.mxu0 0.0
        %1435 = vmatpush1.msra.mxu0 0.0
        %1436 = vmatprep.subr.mxu0 0.0
        %1437 = vmatpush1.msra.mxu0 0.0
        %1438 = vmatprep.subr.mxu0 0.0
        %1439 = vmatpush1.msra.mxu0 0.0
        %1440 = vmatprep.subr.mxu0 0.0
        %1441 = vmatpush1.msra.mxu0 0.0
        %1442 = vmatprep.subr.mxu0 0.0
        %1443 = vmatpush1.msra.mxu0 0.0
        %1444 = vmatprep.subr.mxu0 0.0
        %1445 = vmatpush1.msra.mxu0 0.0
        %1446 = vmatprep.subr.mxu0 0.0
        %1447 = vmatpush1.msra.mxu0 0.0
        %1448 = vmatprep.subr.mxu0 0.0
        %1449 = vmatpush1.msra.mxu0 0.0
        %1450 = vmatprep.subr.mxu0 0.0
        %1451 = vmatpush1.msra.mxu0 0.0
        %1452 = vmatprep.subr.mxu0 0.0
        %1453 = vmatpush1.msra.mxu0 0.0
        %1454 = vmatprep.subr.mxu0 0.0
        %1455 = vmatpush1.msra.mxu0 0.0
        %1456 = vmatprep.mubr.f32.mxu0 0.0
        %1457 = vmatmul.mubr.f32.gmra.mrb[0].mxu0 %v1390
        %v1458 = vpop.f32.mrb[0].mxu0
        %v1459 = vadd.f32 0.0, %v1458
        %v1460 = vpop.f32.mrb[0].mxu0
        %1461 = vdwg.mxu0
        %v1462 = vrcp.pop %v1385
        %v1463 = vmul.f32 %v1459, %v1462
        %v1465 = vsel %vm381, %v1463, 0
        %1467 = vmatprep.subr.mxu0 0.0
        %1468 = vmatpush1.msra.mxu0 %v570
        %1469 = vmatprep.subr.mxu0 0.0
        %1470 = vmatpush1.msra.mxu0 %v571
        %1471 = vmatprep.subr.mxu0 0.0
        %1472 = vmatpush1.msra.mxu0 %v572
        %1473 = vmatprep.subr.mxu0 0.0
        %1474 = vmatpush1.msra.mxu0 %v573
        %1475 = vmatprep.subr.mxu0 0.0
        %1476 = vmatpush1.msra.mxu0 0.0
        %1477 = vmatprep.subr.mxu0 0.0
        %1478 = vmatpush1.msra.mxu0 0.0
        %1479 = vmatprep.subr.mxu0 0.0
        %1480 = vmatpush1.msra.mxu0 0.0
        %1481 = vmatprep.subr.mxu0 0.0
        %1482 = vmatpush1.msra.mxu0 0.0
        %1483 = vmatprep.subr.mxu0 0.0
        %1484 = vmatpush1.msra.mxu0 0.0
        %1485 = vmatprep.subr.mxu0 0.0
        %1486 = vmatpush1.msra.mxu0 0.0
        %1487 = vmatprep.subr.mxu0 0.0
        %1488 = vmatpush1.msra.mxu0 0.0
        %1489 = vmatprep.subr.mxu0 0.0
        %1490 = vmatpush1.msra.mxu0 0.0
        %1491 = vmatprep.subr.mxu0 0.0
        %1492 = vmatpush1.msra.mxu0 0.0
        %1493 = vmatprep.subr.mxu0 0.0
        %1494 = vmatpush1.msra.mxu0 0.0
        %1495 = vmatprep.subr.mxu0 0.0
        %1496 = vmatpush1.msra.mxu0 0.0
        %1497 = vmatprep.subr.mxu0 0.0
        %1498 = vmatpush1.msra.mxu0 0.0
        %1499 = vmatprep.subr.mxu0 0.0
        %1500 = vmatpush1.msra.mxu0 0.0
        %1501 = vmatprep.subr.mxu0 0.0
        %1502 = vmatpush1.msra.mxu0 0.0
        %1503 = vmatprep.subr.mxu0 0.0
        %1504 = vmatpush1.msra.mxu0 0.0
        %1505 = vmatprep.subr.mxu0 0.0
        %1506 = vmatpush1.msra.mxu0 0.0
        %1507 = vmatprep.subr.mxu0 0.0
        %1508 = vmatpush1.msra.mxu0 0.0
        %1509 = vmatprep.subr.mxu0 0.0
        %1510 = vmatpush1.msra.mxu0 0.0
        %1511 = vmatprep.subr.mxu0 0.0
        %1512 = vmatpush1.msra.mxu0 0.0
        %1513 = vmatprep.subr.mxu0 0.0
        %1514 = vmatpush1.msra.mxu0 0.0
        %1515 = vmatprep.subr.mxu0 0.0
        %1516 = vmatpush1.msra.mxu0 0.0
        %1517 = vmatprep.subr.mxu0 0.0
        %1518 = vmatpush1.msra.mxu0 0.0
        %1519 = vmatprep.subr.mxu0 0.0
        %1520 = vmatpush1.msra.mxu0 0.0
        %1521 = vmatprep.subr.mxu0 0.0
        %1522 = vmatpush1.msra.mxu0 0.0
        %1523 = vmatprep.subr.mxu0 0.0
        %1524 = vmatpush1.msra.mxu0 0.0
        %1525 = vmatprep.subr.mxu0 0.0
        %1526 = vmatpush1.msra.mxu0 0.0
        %1527 = vmatprep.subr.mxu0 0.0
        %1528 = vmatpush1.msra.mxu0 0.0
        %1529 = vmatprep.subr.mxu0 0.0
        %1530 = vmatpush1.msra.mxu0 0.0
        %1531 = vmatprep.mubr.f32.mxu0 0.0
        %1532 = vmatmul.mubr.f32.gmra.mrb[0].mxu0 %v1465
        %v1533 = vpop.f32.mrb[0].mxu0
        %v1534 = vadd.f32 0.0, %v1533
        %v1535 = vpop.f32.mrb[0].mxu0
        %1536 = vdwg.mxu0
        %v1537 = vadd.f32 %v1296, %v1534
        %v1538 = vld [vmem:[%s7] sm:$0x1]
        %v1540 = vlaneseq
        %v1541 = vshrl.u32 %v1540, 7
        %v1542 = vsub.s32 0, %v1541
        %v1543 = vrot.slane %v1538, %v1542
        %v1545 = vadd.f32 %v1537, %v1543
        %1546 = vst.msk [vmem:[%s352] sm:$0xff] %vm381, %v1545
        %s1547 = sand.u32 %s231, 1
        %s1548 = scalar_lea.sflag [#allocation3], %s1547
        %s1549 = sand.u32 %s231, 1
        %s1550 = smul.addr %s1549, 8
        %s1551 = scalar_lea.vmem [#allocation2], %s1550
        // Predicated region
        $region53: #{tpu_custom_call.1} parent=51 // pred_check
          %p1552 = pneg %p241
        $region54: #{tpu_custom_call.1} parent=51 // pred_check_branch
          %1554 = sbr.rel (%p1552) target = $region56
        $region55: #{tpu_custom_call.1} parent=51 // pred_region
          %s1556 = ssub.s32 128, 128
          %1557 = vsyncadd %s1548, %s1556
          %s1558 = sadd.s32 %s27, %s26
          %s1559 = smul.addr %s1558, 128
          %s1560 = scalar_lea.hbm %s8, %s1559
          %s1562 = sshll.u32 %s1551, 4
          %s1563 = int_to_ptr.vmem [resolvable:$true] %s1562
          %1565 = dma.vmem_to_hbm [thread:$0]  %s1563, 128, %s1560, %s1548
        $region56: #{tpu_custom_call.1} parent=51 // pred_fallthru
          _
      $region52: #{tpu_custom_call.1} parent=5 // pred_fallthru
        _
      %p1566 = scmp.le.s32.totalorder 2, %s17
      // Predicated region
      $region57: #{tpu_custom_call.1} parent=5 // pred_check
        %p1567 = pneg %p1566
      $region58: #{tpu_custom_call.1} parent=5 // pred_check_branch
        %1569 = sbr.rel (%p1567) target = $region60
      $region59: #{tpu_custom_call.1} parent=5 // pred_region
        %s1570 = ssub.s32 %s17, 2
        // Predicated region
        $region61: #{tpu_custom_call.1} parent=59 // pred_check
          %p1571 = pneg %p247
        $region62: #{tpu_custom_call.1} parent=59 // pred_check_branch
          %1573 = sbr.rel (%p1571) target = $region64
        $region63: #{tpu_custom_call.1} parent=59 // pred_region
          %s1574 = sand.u32 %s232, 1
          %s1575 = scalar_lea.sflag [#allocation3], %s1574
          %s1576 = sand.u32 %s232, 1
          %s1577 = smul.addr %s1576, 8
          %s1578 = scalar_lea.vmem [#allocation2], %s1577
          %1579 = dma.done %s1575, 128
        $region64: #{tpu_custom_call.1} parent=59 // pred_fallthru
          _
      $region60: #{tpu_custom_call.1} parent=5 // pred_fallthru
        _
    $region6: #{tpu_custom_call.1} parent=1 // loop_footer
      %s21 = sadd.s32 1, %s17
    $region7: #{tpu_custom_call.1} parent=1 // loop_footer_branch
      %16 = sbr.rel target = $region3
    $region8: #{tpu_custom_call.1} parent=1 // loop_exit
      _
    %1580 = vsyncpa [#allocation3], 1
    %s1581 = scalar_lea.sflag [#allocation3], 1
    %1582 = vsyncpa %s1581, 1

</llo_original>
